<compile_context>
chip_gen: v5e
topology: v5e:2x2
jax: 0.10.0
libtpu: 0.0.40
codegen_flags: <defaults>
</compile_context>

<pallas_src>
import math
import functools

import jax
import jax.numpy as jnp
from jax.experimental import pallas as pl
from jax.experimental.pallas import tpu as pltpu


def _layernorm(x, w, b, eps=1e-5):
    mu = jnp.mean(x, axis=-1, keepdims=True)
    var = jnp.mean(jnp.square(x - mu), axis=-1, keepdims=True)
    return (x - mu) * jax.lax.rsqrt(var + eps) * w + b


def _resblock_kernel(x_ref,
                     ln1_w_ref, ln1_b_ref, in_w_ref, in_b_ref,
                     out_w_ref, out_b_ref,
                     ln2_w_ref, ln2_b_ref,
                     fc_w_ref, fc_b_ref, pj_w_ref, pj_b_ref,
                     o_ref, *, n_head):
    layer = pl.program_id(1)

    # Layer 0 of each batch tile: initialize the f32 activation carry (= the
    # output block, which stays VMEM-resident across the layer axis).
    @pl.when(layer == 0)
    def _():
        o_ref[...] = x_ref[...]

    x = o_ref[...]                        # (Nt, L, D) float32 carry
    Nt, L, D = x.shape
    hd = D // n_head
    scale = 1.0 / math.sqrt(hd)

    ln1_w = ln1_w_ref[0]                  # (1, D)  f32
    ln1_b = ln1_b_ref[0]
    in_w = in_w_ref[0]                    # (D, 3D) bf16   (in, out) layout
    in_b = in_b_ref[0]                    # (1, 3D) f32
    out_w = out_w_ref[0]                  # (D, D)  bf16
    out_b = out_b_ref[0]                  # (1, D)  f32
    ln2_w = ln2_w_ref[0]
    ln2_b = ln2_b_ref[0]
    fc_w = fc_w_ref[0]                    # (D, 4D) bf16
    fc_b = fc_b_ref[0]                    # (1, 4D) f32
    pj_w = pj_w_ref[0]                    # (4D, D) bf16
    pj_b = pj_b_ref[0]                    # (1, D)  f32

    # ---- multi-head self-attention (attn_mask is None) ----
    xn = _layernorm(x, ln1_w, ln1_b).astype(jnp.bfloat16)
    qkv = jnp.einsum('nld,de->nle', xn, in_w,
                     preferred_element_type=jnp.float32) + in_b   # (Nt, L, 3D)
    q = qkv[..., :D] * scale
    k = qkv[..., D:2 * D]
    v = qkv[..., 2 * D:]

    # Per-head attention; the output projection is fused into a single K=D
    # matmul after concatenating head outputs (one MXU pass instead of n_head).
    head_outs = []
    for h in range(n_head):               # small static unroll (heads=4 here)
        sl = slice(h * hd, (h + 1) * hd)
        qh = q[..., sl].astype(jnp.bfloat16)
        kh = k[..., sl].astype(jnp.bfloat16)
        vh = v[..., sl].astype(jnp.bfloat16)
        s = jnp.einsum('nld,nmd->nlm', qh, kh,
                       preferred_element_type=jnp.float32)        # (Nt, L, L)
        s = s - jnp.max(s, axis=-1, keepdims=True)
        p = jnp.exp(s)
        p = p * pl.reciprocal(jnp.sum(p, axis=-1, keepdims=True), approx=True)
        head_outs.append(
            jnp.einsum('nlm,nmd->nld', p.astype(jnp.bfloat16), vh,
                       preferred_element_type=jnp.float32))       # (Nt, L, hd)
    attn = jnp.concatenate(head_outs, axis=-1).astype(jnp.bfloat16)
    attn = jnp.einsum('nld,de->nle', attn, out_w,
                      preferred_element_type=jnp.float32) + out_b
    x = x + attn

    # ---- MLP: Linear(D,4D) -> QuickGELU -> Linear(4D,D) ----
    xn2 = _layernorm(x, ln2_w, ln2_b).astype(jnp.bfloat16)
    h1 = jnp.einsum('nld,df->nlf', xn2, fc_w,
                    preferred_element_type=jnp.float32) + fc_b    # (Nt, L, 4D)
    h1 = h1 * jax.nn.sigmoid(1.702 * h1)                          # QuickGELU (f32)
    h2 = jnp.einsum('nlf,fd->nld', h1.astype(jnp.bfloat16), pj_w,
                    preferred_element_type=jnp.float32) + pj_b    # (Nt, L, D)

    o_ref[...] = x + h2


_PARAM_ORDER = ('ln1_w', 'ln1_b', 'in_w', 'in_b', 'out_w', 'out_b',
                'ln2_w', 'ln2_b', 'fc_w', 'fc_b', 'pj_w', 'pj_b')


def _prepare_kernel_params(params):
    """Host-side: (in, out) weight layout + bf16 weights, f32 biases/LN."""
    t = lambda w: jnp.transpose(w, (0, 2, 1)).astype(jnp.bfloat16)
    return {
        'ln1_w': params['ln1_w'].astype(jnp.float32),
        'ln1_b': params['ln1_b'].astype(jnp.float32),
        'in_w': t(params['in_w']),                 # (layers, D, 3D)
        'in_b': params['in_b'].astype(jnp.float32),
        'out_w': t(params['out_w']),               # (layers, D, D)
        'out_b': params['out_b'].astype(jnp.float32),
        'ln2_w': params['ln2_w'].astype(jnp.float32),
        'ln2_b': params['ln2_b'].astype(jnp.float32),
        'fc_w': t(params['fc_w']),                 # (layers, D, 4D)
        'fc_b': params['fc_b'].astype(jnp.float32),
        'pj_w': t(params['pj_w']),                 # (layers, 4D, D)
        'pj_b': params['pj_b'].astype(jnp.float32),
    }


@functools.partial(jax.jit, static_argnums=(2,))
def transformer_forward(x_lnd, params, n_head):
    """x_lnd: (L, N, D) seq-first, like the PyTorch module. Returns (L, N, D)."""
    L, N, D = x_lnd.shape
    layers = params['in_w'].shape[0]
    x_nld = jnp.transpose(x_lnd, (1, 0, 2)).astype(jnp.float32)

    kp = _prepare_kernel_params(params)

    # Batch tiling: 2 tiles when possible -> megacore "parallel" axis on v7x,
    # and a smaller per-step activation footprint everywhere.
    bt = 2 if (N % 2 == 0 and N >= 2) else 1
    nt = N // bt

    in_specs = [pl.BlockSpec((nt, L, D), lambda b, l: (b, 0, 0))]
    args = [x_nld]
    for name in _PARAM_ORDER:
        p = kp[name]
        in_specs.append(pl.BlockSpec((1,) + p.shape[1:], lambda b, l: (l, 0, 0)))
        args.append(p)

    # Rough per-step VMEM need (f32 activations + bf16 double-buffered weights).
    est = (6 * nt * L * D * 4             # carry / LN / attention temps
           + 2 * nt * L * 4 * D * 4       # h1 + gelu
           + nt * L * 3 * D * 4           # qkv
           + 3 * nt * L * L * 4           # scores / probs (per head)
           + 2 * 2 * 12 * D * D           # double-buffered bf16 weights
           + (1 << 20))
    vmem_limit = int(min(max(int(est * 1.5), 16 * 1024 * 1024), 64 * 1024 * 1024))

    flops = 2 * layers * N * L * (12 * D * D + 2 * L * D)
    transcendentals = layers * N * L * (n_head * L + 4 * D)
    bytes_accessed = layers * bt * (12 * D * D * 2) + 2 * N * L * D * 4

    out = pl.pallas_call(
        functools.partial(_resblock_kernel, n_head=n_head),
        out_shape=jax.ShapeDtypeStruct((N, L, D), jnp.float32),
        grid_spec=pltpu.PrefetchScalarGridSpec(
            num_scalar_prefetch=0,
            grid=(bt, layers),
            in_specs=in_specs,
            out_specs=pl.BlockSpec((nt, L, D), lambda b, l: (b, 0, 0)),
            scratch_shapes=[]),
        compiler_params=pltpu.CompilerParams(
            dimension_semantics=("parallel", "arbitrary"),
            vmem_limit_bytes=vmem_limit),
        cost_estimate=pl.CostEstimate(flops=int(flops),
                                      transcendentals=int(transcendentals),
                                      bytes_accessed=int(bytes_accessed)),
        input_output_aliases={0: 0},
    )(*args)
    return jnp.transpose(out, (1, 0, 2))


def init_params(key, width, layers):
    """Deterministic synthetic parameters (PyTorch Linear convention W:(out,in))."""
    D = width
    ks = jax.random.split(key, 8)

    def w(k, shape, scale=0.02):
        return (scale * jax.random.normal(k, shape)).astype(jnp.float32)

    return {
        'ln1_w': jnp.ones((layers, 1, D), jnp.float32),
        'ln1_b': jnp.zeros((layers, 1, D), jnp.float32),
        'in_w': w(ks[0], (layers, 3 * D, D)),
        'in_b': w(ks[1], (layers, 1, 3 * D), 0.01),
        'out_w': w(ks[2], (layers, D, D)),
        'out_b': w(ks[3], (layers, 1, D), 0.01),
        'ln2_w': jnp.ones((layers, 1, D), jnp.float32),
        'ln2_b': jnp.zeros((layers, 1, D), jnp.float32),
        'fc_w': w(ks[4], (layers, 4 * D, D)),
        'fc_b': w(ks[5], (layers, 1, 4 * D), 0.01),
        'pj_w': w(ks[6], (layers, D, 4 * D)),
        'pj_b': w(ks[7], (layers, 1, D), 0.01),
    }


def _ref_ln(x, w, b, eps=1e-5):
    mu = x.mean(-1, keepdims=True)
    var = ((x - mu) ** 2).mean(-1, keepdims=True)
    return (x - mu) / jnp.sqrt(var + eps) * w + b


def reference_forward(x_lnd, params, n_head):
    """Pure-JAX f32 reference matching PyTorch semantics (reshape-based MHA)."""
    x = jnp.transpose(x_lnd, (1, 0, 2)).astype(jnp.float32)  # (N, L, D)
    N, L, D = x.shape
    hd = D // n_head
    layers = params['in_w'].shape[0]
    for i in range(layers):
        xn = _ref_ln(x, params['ln1_w'][i], params['ln1_b'][i])
        qkv = xn @ params['in_w'][i].T + params['in_b'][i]
        q, k, v = jnp.split(qkv, 3, axis=-1)
        q = q.reshape(N, L, n_head, hd).transpose(0, 2, 1, 3) / math.sqrt(hd)
        k = k.reshape(N, L, n_head, hd).transpose(0, 2, 1, 3)
        v = v.reshape(N, L, n_head, hd).transpose(0, 2, 1, 3)
        s = jnp.einsum('nhld,nhmd->nhlm', q, k)
        p = jax.nn.softmax(s, axis=-1)
        o = jnp.einsum('nhlm,nhmd->nhld', p, v).transpose(0, 2, 1, 3).reshape(N, L, D)
        x = x + o @ params['out_w'][i].T + params['out_b'][i]
        xn2 = _ref_ln(x, params['ln2_w'][i], params['ln2_b'][i])
        h1 = xn2 @ params['fc_w'][i].T + params['fc_b'][i]
        h1 = h1 * jax.nn.sigmoid(1.702 * h1)
        x = x + h1 @ params['pj_w'][i].T + params['pj_b'][i]
    return jnp.transpose(x, (1, 0, 2))


if __name__ == "__main__":
    width, layers, heads = 32, 2, 4
    L, N = 8, 2

    key = jax.random.PRNGKey(0)
    kx, kp = jax.random.split(key)
    x = jax.random.normal(kx, (L, N, width), jnp.float32)   # (seq, batch, width)
    params = init_params(kp, width, layers)

    out = transformer_forward(x, params, heads)
    out = jax.block_until_ready(out)
    assert out.shape == (L, N, width)

    # Kernel uses bf16 weights/matmul operands (f32 accumulation), so compare
    # against the f32 reference with a bf16-appropriate tolerance.
    ref = reference_forward(x, params, heads)
    if not jnp.allclose(out, ref, atol=2e-2, rtol=2e-2):
        raise AssertionError(
            f"mismatch vs reference, max abs err = {float(jnp.max(jnp.abs(out - ref)))}")

    print("KERNEL_OK")
</pallas_src>

<mosaic_0001>
module attributes {stable_mosaic.version = 11 : i64} {
  func.func @_resblock_kernel(%arg0: i32, %arg1: i32, %arg2: memref<1x8x32xf32, #tpu.memory_space<vmem>>, %arg3: memref<1x1x32xf32, #tpu.memory_space<vmem>>, %arg4: memref<1x1x32xf32, #tpu.memory_space<vmem>>, %arg5: memref<1x32x96xbf16, #tpu.memory_space<vmem>>, %arg6: memref<1x1x96xf32, #tpu.memory_space<vmem>>, %arg7: memref<1x32x32xbf16, #tpu.memory_space<vmem>>, %arg8: memref<1x1x32xf32, #tpu.memory_space<vmem>>, %arg9: memref<1x1x32xf32, #tpu.memory_space<vmem>>, %arg10: memref<1x1x32xf32, #tpu.memory_space<vmem>>, %arg11: memref<1x32x128xbf16, #tpu.memory_space<vmem>>, %arg12: memref<1x1x128xf32, #tpu.memory_space<vmem>>, %arg13: memref<1x128x32xbf16, #tpu.memory_space<vmem>>, %arg14: memref<1x1x32xf32, #tpu.memory_space<vmem>>, %arg15: memref<1x8x32xf32, #tpu.memory_space<vmem>>) attributes {dimension_semantics = [#tpu.dimension_semantics<parallel>, #tpu.dimension_semantics<arbitrary>], iteration_bounds = array<i64: 2, 2>, scalar_prefetch = 0 : i64, scratch_operands = 0 : i64, tpu.core_type = #tpu.core_type<tc>, window_params = [{transform_indices = @transform_0, window_bounds = array<i64: 1, 8, 32>}, {transform_indices = @transform_1, window_bounds = array<i64: 1, 1, 32>}, {transform_indices = @transform_2, window_bounds = array<i64: 1, 1, 32>}, {transform_indices = @transform_3, window_bounds = array<i64: 1, 32, 96>}, {transform_indices = @transform_4, window_bounds = array<i64: 1, 1, 96>}, {transform_indices = @transform_5, window_bounds = array<i64: 1, 32, 32>}, {transform_indices = @transform_6, window_bounds = array<i64: 1, 1, 32>}, {transform_indices = @transform_7, window_bounds = array<i64: 1, 1, 32>}, {transform_indices = @transform_8, window_bounds = array<i64: 1, 1, 32>}, {transform_indices = @transform_9, window_bounds = array<i64: 1, 32, 128>}, {transform_indices = @transform_10, window_bounds = array<i64: 1, 1, 128>}, {transform_indices = @transform_11, window_bounds = array<i64: 1, 128, 32>}, {transform_indices = @transform_12, window_bounds = array<i64: 1, 1, 32>}, {transform_indices = @transform_13, window_bounds = array<i64: 1, 8, 32>}]} {
    %c0_i32 = arith.constant 0 : i32
    %0 = arith.cmpi eq, %arg1, %c0_i32 : i32
    %1 = arith.extui %0 : i1 to i32
    %c0_i32_0 = arith.constant 0 : i32
    %2 = arith.cmpi ne, %1, %c0_i32_0 : i32
    scf.if %2 {
      %c0_74 = arith.constant 0 : index
      %c0_75 = arith.constant 0 : index
      %c0_76 = arith.constant 0 : index
      %189 = vector.load %arg2[%c0_74, %c0_75, %c0_76] : memref<1x8x32xf32, #tpu.memory_space<vmem>>, vector<1x8x32xf32>
      %c0_77 = arith.constant 0 : index
      %c0_78 = arith.constant 0 : index
      %c0_79 = arith.constant 0 : index
      %190 = vector.load %arg15[%c0_77, %c0_78, %c0_79] : memref<1x8x32xf32, #tpu.memory_space<vmem>>, vector<1x8x32xf32>
      tpu.vector_store %arg15[%c0_77, %c0_78, %c0_79], %189 {strides = array<i32>} : memref<1x8x32xf32, #tpu.memory_space<vmem>>, vector<1x8x32xf32>,
    } else {
    }
    %c0 = arith.constant 0 : index
    %c0_1 = arith.constant 0 : index
    %c0_2 = arith.constant 0 : index
    %3 = vector.load %arg15[%c0, %c0_1, %c0_2] : memref<1x8x32xf32, #tpu.memory_space<vmem>>, vector<1x8x32xf32>
    %c0_3 = arith.constant 0 : index
    %c0_4 = arith.constant 0 : index
    %c0_5 = arith.constant 0 : index
    %4 = vector.load %arg3[%c0_3, %c0_4, %c0_5] : memref<1x1x32xf32, #tpu.memory_space<vmem>>, vector<1x1x32xf32>
    %5 = vector.shape_cast %4 : vector<1x1x32xf32> to vector<1x32xf32>
    %c0_6 = arith.constant 0 : index
    %c0_7 = arith.constant 0 : index
    %c0_8 = arith.constant 0 : index
    %6 = vector.load %arg4[%c0_6, %c0_7, %c0_8] : memref<1x1x32xf32, #tpu.memory_space<vmem>>, vector<1x1x32xf32>
    %7 = vector.shape_cast %6 : vector<1x1x32xf32> to vector<1x32xf32>
    %c0_9 = arith.constant 0 : index
    %c0_10 = arith.constant 0 : index
    %c0_11 = arith.constant 0 : index
    %8 = vector.load %arg5[%c0_9, %c0_10, %c0_11] : memref<1x32x96xbf16, #tpu.memory_space<vmem>>, vector<1x32x96xbf16>
    %9 = vector.shape_cast %8 : vector<1x32x96xbf16> to vector<32x96xbf16>
    %c0_12 = arith.constant 0 : index
    %c0_13 = arith.constant 0 : index
    %c0_14 = arith.constant 0 : index
    %10 = vector.load %arg6[%c0_12, %c0_13, %c0_14] : memref<1x1x96xf32, #tpu.memory_space<vmem>>, vector<1x1x96xf32>
    %11 = vector.shape_cast %10 : vector<1x1x96xf32> to vector<1x96xf32>
    %c0_15 = arith.constant 0 : index
    %c0_16 = arith.constant 0 : index
    %c0_17 = arith.constant 0 : index
    %12 = vector.load %arg7[%c0_15, %c0_16, %c0_17] : memref<1x32x32xbf16, #tpu.memory_space<vmem>>, vector<1x32x32xbf16>
    %13 = vector.shape_cast %12 : vector<1x32x32xbf16> to vector<32x32xbf16>
    %c0_18 = arith.constant 0 : index
    %c0_19 = arith.constant 0 : index
    %c0_20 = arith.constant 0 : index
    %14 = vector.load %arg8[%c0_18, %c0_19, %c0_20] : memref<1x1x32xf32, #tpu.memory_space<vmem>>, vector<1x1x32xf32>
    %15 = vector.shape_cast %14 : vector<1x1x32xf32> to vector<1x32xf32>
    %c0_21 = arith.constant 0 : index
    %c0_22 = arith.constant 0 : index
    %c0_23 = arith.constant 0 : index
    %16 = vector.load %arg9[%c0_21, %c0_22, %c0_23] : memref<1x1x32xf32, #tpu.memory_space<vmem>>, vector<1x1x32xf32>
    %17 = vector.shape_cast %16 : vector<1x1x32xf32> to vector<1x32xf32>
    %c0_24 = arith.constant 0 : index
    %c0_25 = arith.constant 0 : index
    %c0_26 = arith.constant 0 : index
    %18 = vector.load %arg10[%c0_24, %c0_25, %c0_26] : memref<1x1x32xf32, #tpu.memory_space<vmem>>, vector<1x1x32xf32>
    %19 = vector.shape_cast %18 : vector<1x1x32xf32> to vector<1x32xf32>
    %c0_27 = arith.constant 0 : index
    %c0_28 = arith.constant 0 : index
    %c0_29 = arith.constant 0 : index
    %20 = vector.load %arg11[%c0_27, %c0_28, %c0_29] : memref<1x32x128xbf16, #tpu.memory_space<vmem>>, vector<1x32x128xbf16>
    %21 = vector.shape_cast %20 : vector<1x32x128xbf16> to vector<32x128xbf16>
    %c0_30 = arith.constant 0 : index
    %c0_31 = arith.constant 0 : index
    %c0_32 = arith.constant 0 : index
    %22 = vector.load %arg12[%c0_30, %c0_31, %c0_32] : memref<1x1x128xf32, #tpu.memory_space<vmem>>, vector<1x1x128xf32>
    %23 = vector.shape_cast %22 : vector<1x1x128xf32> to vector<1x128xf32>
    %c0_33 = arith.constant 0 : index
    %c0_34 = arith.constant 0 : index
    %c0_35 = arith.constant 0 : index
    %24 = vector.load %arg13[%c0_33, %c0_34, %c0_35] : memref<1x128x32xbf16, #tpu.memory_space<vmem>>, vector<1x128x32xbf16>
    %25 = vector.shape_cast %24 : vector<1x128x32xbf16> to vector<128x32xbf16>
    %c0_36 = arith.constant 0 : index
    %c0_37 = arith.constant 0 : index
    %c0_38 = arith.constant 0 : index
    %26 = vector.load %arg14[%c0_36, %c0_37, %c0_38] : memref<1x1x32xf32, #tpu.memory_space<vmem>>, vector<1x1x32xf32>
    %27 = vector.shape_cast %26 : vector<1x1x32xf32> to vector<1x32xf32>
    %cst = arith.constant dense<0.000000e+00> : vector<1x8xf32>
    %28 = vector.multi_reduction <add>, %3, %cst [2] : vector<1x8x32xf32> to vector<1x8xf32>
    %29 = vector.shape_cast %28 : vector<1x8xf32> to vector<1x8x1xf32>
    %cst_39 = arith.constant 3.200000e+01 : f32
    %30 = vector.broadcast %cst_39 : f32 to vector<1x8x1xf32>
    %31 = arith.divf %29, %30 : vector<1x8x1xf32>
    %32 = vector.broadcast %31 : vector<1x8x1xf32> to vector<1x8x32xf32>
    %33 = arith.subf %3, %32 : vector<1x8x32xf32>
    %34 = arith.mulf %33, %33 : vector<1x8x32xf32>
    %cst_40 = arith.constant dense<0.000000e+00> : vector<1x8xf32>
    %35 = vector.multi_reduction <add>, %34, %cst_40 [2] : vector<1x8x32xf32> to vector<1x8xf32>
    %36 = vector.shape_cast %35 : vector<1x8xf32> to vector<1x8x1xf32>
    %cst_41 = arith.constant 3.200000e+01 : f32
    %37 = vector.broadcast %cst_41 : f32 to vector<1x8x1xf32>
    %38 = arith.divf %36, %37 : vector<1x8x1xf32>
    %39 = vector.broadcast %31 : vector<1x8x1xf32> to vector<1x8x32xf32>
    %40 = arith.subf %3, %39 : vector<1x8x32xf32>
    %cst_42 = arith.constant 9.99999974E-6 : f32
    %41 = vector.broadcast %cst_42 : f32 to vector<1x8x1xf32>
    %42 = arith.addf %38, %41 : vector<1x8x1xf32>
    %43 = math.rsqrt %42 : vector<1x8x1xf32>
    %44 = vector.broadcast %43 : vector<1x8x1xf32> to vector<1x8x32xf32>
    %45 = arith.mulf %40, %44 : vector<1x8x32xf32>
    %46 = vector.shape_cast %5 : vector<1x32xf32> to vector<1x1x32xf32>
    %47 = vector.broadcast %46 : vector<1x1x32xf32> to vector<1x8x32xf32>
    %48 = arith.mulf %45, %47 : vector<1x8x32xf32>
    %49 = vector.shape_cast %7 : vector<1x32xf32> to vector<1x1x32xf32>
    %50 = vector.broadcast %49 : vector<1x1x32xf32> to vector<1x8x32xf32>
    %51 = arith.addf %48, %50 : vector<1x8x32xf32>
    %52 = arith.truncf %51 : vector<1x8x32xf32> to vector<1x8x32xbf16>
    "tpu.trace_start"() <{level = 10 : i32, message = "nld,de->nle"}> : () -> ()
    %cst_43 = arith.constant dense<0.000000e+00> : vector<1x8x96xf32>
    %53 = tpu.matmul %52, %9, %cst_43 {dimension_numbers = #tpu.dot_dimension_numbers<[2], [0], [0, 1], [1], [0, 0, 0, 1, 1, 1], [], []>} : vector<1x8x32xbf16>, vector<32x96xbf16>, vector<1x8x96xf32> -> vector<1x8x96xf32>
    "tpu.trace_stop"() : () -> ()
    %54 = vector.shape_cast %11 : vector<1x96xf32> to vector<1x1x96xf32>
    %55 = vector.broadcast %54 : vector<1x1x96xf32> to vector<1x8x96xf32>
    %56 = arith.addf %53, %55 : vector<1x8x96xf32>
    %57 = vector.extract_strided_slice %56 {offsets = [0, 0, 0], sizes = [1, 8, 32], strides = [1, 1, 1]} : vector<1x8x96xf32> to vector<1x8x32xf32>
    %cst_44 = arith.constant 0.353553385 : f32
    %58 = vector.broadcast %cst_44 : f32 to vector<1x8x32xf32>
    %59 = arith.mulf %57, %58 : vector<1x8x32xf32>
    %60 = vector.extract_strided_slice %56 {offsets = [0, 0, 32], sizes = [1, 8, 32], strides = [1, 1, 1]} : vector<1x8x96xf32> to vector<1x8x32xf32>
    %61 = vector.extract_strided_slice %56 {offsets = [0, 0, 64], sizes = [1, 8, 32], strides = [1, 1, 1]} : vector<1x8x96xf32> to vector<1x8x32xf32>
    %62 = vector.extract_strided_slice %59 {offsets = [0, 0, 0], sizes = [1, 8, 8], strides = [1, 1, 1]} : vector<1x8x32xf32> to vector<1x8x8xf32>
    %63 = arith.truncf %62 : vector<1x8x8xf32> to vector<1x8x8xbf16>
    %64 = vector.extract_strided_slice %60 {offsets = [0, 0, 0], sizes = [1, 8, 8], strides = [1, 1, 1]} : vector<1x8x32xf32> to vector<1x8x8xf32>
    %65 = arith.truncf %64 : vector<1x8x8xf32> to vector<1x8x8xbf16>
    %66 = vector.extract_strided_slice %61 {offsets = [0, 0, 0], sizes = [1, 8, 8], strides = [1, 1, 1]} : vector<1x8x32xf32> to vector<1x8x8xf32>
    %67 = arith.truncf %66 : vector<1x8x8xf32> to vector<1x8x8xbf16>
    "tpu.trace_start"() <{level = 10 : i32, message = "nld,nmd->nlm"}> : () -> ()
    %cst_45 = arith.constant dense<0.000000e+00> : vector<1x8x8xf32>
    %68 = tpu.matmul %63, %65, %cst_45 {dimension_numbers = #tpu.dot_dimension_numbers<[2], [2], [1], [1], [0, 0, 0, 1, 1, 1], [0], [0]>} : vector<1x8x8xbf16>, vector<1x8x8xbf16>, vector<1x8x8xf32> -> vector<1x8x8xf32>
    "tpu.trace_stop"() : () -> ()
    %cst_46 = arith.constant dense<0xFF800000> : vector<1x8xf32>
    %69 = vector.multi_reduction <maximumf>, %68, %cst_46 [2] : vector<1x8x8xf32> to vector<1x8xf32>
    %70 = vector.shape_cast %69 : vector<1x8xf32> to vector<1x8x1xf32>
    %71 = vector.broadcast %70 : vector<1x8x1xf32> to vector<1x8x8xf32>
    %72 = arith.subf %68, %71 : vector<1x8x8xf32>
    %73 = math.exp %72 : vector<1x8x8xf32>
    %cst_47 = arith.constant dense<0.000000e+00> : vector<1x8xf32>
    %74 = vector.multi_reduction <add>, %73, %cst_47 [2] : vector<1x8x8xf32> to vector<1x8xf32>
    %75 = vector.shape_cast %74 : vector<1x8xf32> to vector<1x8x1xf32>
    %76 = tpu.reciprocal %75 {approx = true} : vector<1x8x1xf32> -> vector<1x8x1xf32>
    %77 = vector.broadcast %76 : vector<1x8x1xf32> to vector<1x8x8xf32>
    %78 = arith.mulf %73, %77 : vector<1x8x8xf32>
    %79 = arith.truncf %78 : vector<1x8x8xf32> to vector<1x8x8xbf16>
    "tpu.trace_start"() <{level = 10 : i32, message = "nlm,nmd->nld"}> : () -> ()
    %cst_48 = arith.constant dense<0.000000e+00> : vector<1x8x8xf32>
    %80 = tpu.matmul %79, %67, %cst_48 {dimension_numbers = #tpu.dot_dimension_numbers<[2], [1], [1], [2], [0, 0, 0, 1, 1, 2], [0], [0]>} : vector<1x8x8xbf16>, vector<1x8x8xbf16>, vector<1x8x8xf32> -> vector<1x8x8xf32>
    "tpu.trace_stop"() : () -> ()
    %81 = vector.extract_strided_slice %59 {offsets = [0, 0, 8], sizes = [1, 8, 8], strides = [1, 1, 1]} : vector<1x8x32xf32> to vector<1x8x8xf32>
    %82 = arith.truncf %81 : vector<1x8x8xf32> to vector<1x8x8xbf16>
    %83 = vector.extract_strided_slice %60 {offsets = [0, 0, 8], sizes = [1, 8, 8], strides = [1, 1, 1]} : vector<1x8x32xf32> to vector<1x8x8xf32>
    %84 = arith.truncf %83 : vector<1x8x8xf32> to vector<1x8x8xbf16>
    %85 = vector.extract_strided_slice %61 {offsets = [0, 0, 8], sizes = [1, 8, 8], strides = [1, 1, 1]} : vector<1x8x32xf32> to vector<1x8x8xf32>
    %86 = arith.truncf %85 : vector<1x8x8xf32> to vector<1x8x8xbf16>
    "tpu.trace_start"() <{level = 10 : i32, message = "nld,nmd->nlm"}> : () -> ()
    %cst_49 = arith.constant dense<0.000000e+00> : vector<1x8x8xf32>
    %87 = tpu.matmul %82, %84, %cst_49 {dimension_numbers = #tpu.dot_dimension_numbers<[2], [2], [1], [1], [0, 0, 0, 1, 1, 1], [0], [0]>} : vector<1x8x8xbf16>, vector<1x8x8xbf16>, vector<1x8x8xf32> -> vector<1x8x8xf32>
    "tpu.trace_stop"() : () -> ()
    %cst_50 = arith.constant dense<0xFF800000> : vector<1x8xf32>
    %88 = vector.multi_reduction <maximumf>, %87, %cst_50 [2] : vector<1x8x8xf32> to vector<1x8xf32>
    %89 = vector.shape_cast %88 : vector<1x8xf32> to vector<1x8x1xf32>
    %90 = vector.broadcast %89 : vector<1x8x1xf32> to vector<1x8x8xf32>
    %91 = arith.subf %87, %90 : vector<1x8x8xf32>
    %92 = math.exp %91 : vector<1x8x8xf32>
    %cst_51 = arith.constant dense<0.000000e+00> : vector<1x8xf32>
    %93 = vector.multi_reduction <add>, %92, %cst_51 [2] : vector<1x8x8xf32> to vector<1x8xf32>
    %94 = vector.shape_cast %93 : vector<1x8xf32> to vector<1x8x1xf32>
    %95 = tpu.reciprocal %94 {approx = true} : vector<1x8x1xf32> -> vector<1x8x1xf32>
    %96 = vector.broadcast %95 : vector<1x8x1xf32> to vector<1x8x8xf32>
    %97 = arith.mulf %92, %96 : vector<1x8x8xf32>
    %98 = arith.truncf %97 : vector<1x8x8xf32> to vector<1x8x8xbf16>
    "tpu.trace_start"() <{level = 10 : i32, message = "nlm,nmd->nld"}> : () -> ()
    %cst_52 = arith.constant dense<0.000000e+00> : vector<1x8x8xf32>
    %99 = tpu.matmul %98, %86, %cst_52 {dimension_numbers = #tpu.dot_dimension_numbers<[2], [1], [1], [2], [0, 0, 0, 1, 1, 2], [0], [0]>} : vector<1x8x8xbf16>, vector<1x8x8xbf16>, vector<1x8x8xf32> -> vector<1x8x8xf32>
    "tpu.trace_stop"() : () -> ()
    %100 = vector.extract_strided_slice %59 {offsets = [0, 0, 16], sizes = [1, 8, 8], strides = [1, 1, 1]} : vector<1x8x32xf32> to vector<1x8x8xf32>
    %101 = arith.truncf %100 : vector<1x8x8xf32> to vector<1x8x8xbf16>
    %102 = vector.extract_strided_slice %60 {offsets = [0, 0, 16], sizes = [1, 8, 8], strides = [1, 1, 1]} : vector<1x8x32xf32> to vector<1x8x8xf32>
    %103 = arith.truncf %102 : vector<1x8x8xf32> to vector<1x8x8xbf16>
    %104 = vector.extract_strided_slice %61 {offsets = [0, 0, 16], sizes = [1, 8, 8], strides = [1, 1, 1]} : vector<1x8x32xf32> to vector<1x8x8xf32>
    %105 = arith.truncf %104 : vector<1x8x8xf32> to vector<1x8x8xbf16>
    "tpu.trace_start"() <{level = 10 : i32, message = "nld,nmd->nlm"}> : () -> ()
    %cst_53 = arith.constant dense<0.000000e+00> : vector<1x8x8xf32>
    %106 = tpu.matmul %101, %103, %cst_53 {dimension_numbers = #tpu.dot_dimension_numbers<[2], [2], [1], [1], [0, 0, 0, 1, 1, 1], [0], [0]>} : vector<1x8x8xbf16>, vector<1x8x8xbf16>, vector<1x8x8xf32> -> vector<1x8x8xf32>
    "tpu.trace_stop"() : () -> ()
    %cst_54 = arith.constant dense<0xFF800000> : vector<1x8xf32>
    %107 = vector.multi_reduction <maximumf>, %106, %cst_54 [2] : vector<1x8x8xf32> to vector<1x8xf32>
    %108 = vector.shape_cast %107 : vector<1x8xf32> to vector<1x8x1xf32>
    %109 = vector.broadcast %108 : vector<1x8x1xf32> to vector<1x8x8xf32>
    %110 = arith.subf %106, %109 : vector<1x8x8xf32>
    %111 = math.exp %110 : vector<1x8x8xf32>
    %cst_55 = arith.constant dense<0.000000e+00> : vector<1x8xf32>
    %112 = vector.multi_reduction <add>, %111, %cst_55 [2] : vector<1x8x8xf32> to vector<1x8xf32>
    %113 = vector.shape_cast %112 : vector<1x8xf32> to vector<1x8x1xf32>
    %114 = tpu.reciprocal %113 {approx = true} : vector<1x8x1xf32> -> vector<1x8x1xf32>
    %115 = vector.broadcast %114 : vector<1x8x1xf32> to vector<1x8x8xf32>
    %116 = arith.mulf %111, %115 : vector<1x8x8xf32>
    %117 = arith.truncf %116 : vector<1x8x8xf32> to vector<1x8x8xbf16>
    "tpu.trace_start"() <{level = 10 : i32, message = "nlm,nmd->nld"}> : () -> ()
    %cst_56 = arith.constant dense<0.000000e+00> : vector<1x8x8xf32>
    %118 = tpu.matmul %117, %105, %cst_56 {dimension_numbers = #tpu.dot_dimension_numbers<[2], [1], [1], [2], [0, 0, 0, 1, 1, 2], [0], [0]>} : vector<1x8x8xbf16>, vector<1x8x8xbf16>, vector<1x8x8xf32> -> vector<1x8x8xf32>
    "tpu.trace_stop"() : () -> ()
    %119 = vector.extract_strided_slice %59 {offsets = [0, 0, 24], sizes = [1, 8, 8], strides = [1, 1, 1]} : vector<1x8x32xf32> to vector<1x8x8xf32>
    %120 = arith.truncf %119 : vector<1x8x8xf32> to vector<1x8x8xbf16>
    %121 = vector.extract_strided_slice %60 {offsets = [0, 0, 24], sizes = [1, 8, 8], strides = [1, 1, 1]} : vector<1x8x32xf32> to vector<1x8x8xf32>
    %122 = arith.truncf %121 : vector<1x8x8xf32> to vector<1x8x8xbf16>
    %123 = vector.extract_strided_slice %61 {offsets = [0, 0, 24], sizes = [1, 8, 8], strides = [1, 1, 1]} : vector<1x8x32xf32> to vector<1x8x8xf32>
    %124 = arith.truncf %123 : vector<1x8x8xf32> to vector<1x8x8xbf16>
    "tpu.trace_start"() <{level = 10 : i32, message = "nld,nmd->nlm"}> : () -> ()
    %cst_57 = arith.constant dense<0.000000e+00> : vector<1x8x8xf32>
    %125 = tpu.matmul %120, %122, %cst_57 {dimension_numbers = #tpu.dot_dimension_numbers<[2], [2], [1], [1], [0, 0, 0, 1, 1, 1], [0], [0]>} : vector<1x8x8xbf16>, vector<1x8x8xbf16>, vector<1x8x8xf32> -> vector<1x8x8xf32>
    "tpu.trace_stop"() : () -> ()
    %cst_58 = arith.constant dense<0xFF800000> : vector<1x8xf32>
    %126 = vector.multi_reduction <maximumf>, %125, %cst_58 [2] : vector<1x8x8xf32> to vector<1x8xf32>
    %127 = vector.shape_cast %126 : vector<1x8xf32> to vector<1x8x1xf32>
    %128 = vector.broadcast %127 : vector<1x8x1xf32> to vector<1x8x8xf32>
    %129 = arith.subf %125, %128 : vector<1x8x8xf32>
    %130 = math.exp %129 : vector<1x8x8xf32>
    %cst_59 = arith.constant dense<0.000000e+00> : vector<1x8xf32>
    %131 = vector.multi_reduction <add>, %130, %cst_59 [2] : vector<1x8x8xf32> to vector<1x8xf32>
    %132 = vector.shape_cast %131 : vector<1x8xf32> to vector<1x8x1xf32>
    %133 = tpu.reciprocal %132 {approx = true} : vector<1x8x1xf32> -> vector<1x8x1xf32>
    %134 = vector.broadcast %133 : vector<1x8x1xf32> to vector<1x8x8xf32>
    %135 = arith.mulf %130, %134 : vector<1x8x8xf32>
    %136 = arith.truncf %135 : vector<1x8x8xf32> to vector<1x8x8xbf16>
    "tpu.trace_start"() <{level = 10 : i32, message = "nlm,nmd->nld"}> : () -> ()
    %cst_60 = arith.constant dense<0.000000e+00> : vector<1x8x8xf32>
    %137 = tpu.matmul %136, %124, %cst_60 {dimension_numbers = #tpu.dot_dimension_numbers<[2], [1], [1], [2], [0, 0, 0, 1, 1, 2], [0], [0]>} : vector<1x8x8xbf16>, vector<1x8x8xbf16>, vector<1x8x8xf32> -> vector<1x8x8xf32>
    "tpu.trace_stop"() : () -> ()
    %138 = tpu.concatenate %80, %99, %118, %137 in 2 : vector<1x8x8xf32>, vector<1x8x8xf32>, vector<1x8x8xf32>, vector<1x8x8xf32> -> vector<1x8x32xf32>
    %139 = arith.truncf %138 : vector<1x8x32xf32> to vector<1x8x32xbf16>
    "tpu.trace_start"() <{level = 10 : i32, message = "nld,de->nle"}> : () -> ()
    %cst_61 = arith.constant dense<0.000000e+00> : vector<1x8x32xf32>
    %140 = tpu.matmul %139, %13, %cst_61 {dimension_numbers = #tpu.dot_dimension_numbers<[2], [0], [0, 1], [1], [0, 0, 0, 1, 1, 1], [], []>} : vector<1x8x32xbf16>, vector<32x32xbf16>, vector<1x8x32xf32> -> vector<1x8x32xf32>
    "tpu.trace_stop"() : () -> ()
    %141 = vector.shape_cast %15 : vector<1x32xf32> to vector<1x1x32xf32>
    %142 = vector.broadcast %141 : vector<1x1x32xf32> to vector<1x8x32xf32>
    %143 = arith.addf %140, %142 : vector<1x8x32xf32>
    %144 = arith.addf %3, %143 : vector<1x8x32xf32>
    %cst_62 = arith.constant dense<0.000000e+00> : vector<1x8xf32>
    %145 = vector.multi_reduction <add>, %144, %cst_62 [2] : vector<1x8x32xf32> to vector<1x8xf32>
    %146 = vector.shape_cast %145 : vector<1x8xf32> to vector<1x8x1xf32>
    %cst_63 = arith.constant 3.200000e+01 : f32
    %147 = vector.broadcast %cst_63 : f32 to vector<1x8x1xf32>
    %148 = arith.divf %146, %147 : vector<1x8x1xf32>
    %149 = vector.broadcast %148 : vector<1x8x1xf32> to vector<1x8x32xf32>
    %150 = arith.subf %144, %149 : vector<1x8x32xf32>
    %151 = arith.mulf %150, %150 : vector<1x8x32xf32>
    %cst_64 = arith.constant dense<0.000000e+00> : vector<1x8xf32>
    %152 = vector.multi_reduction <add>, %151, %cst_64 [2] : vector<1x8x32xf32> to vector<1x8xf32>
    %153 = vector.shape_cast %152 : vector<1x8xf32> to vector<1x8x1xf32>
    %cst_65 = arith.constant 3.200000e+01 : f32
    %154 = vector.broadcast %cst_65 : f32 to vector<1x8x1xf32>
    %155 = arith.divf %153, %154 : vector<1x8x1xf32>
    %156 = vector.broadcast %148 : vector<1x8x1xf32> to vector<1x8x32xf32>
    %157 = arith.subf %144, %156 : vector<1x8x32xf32>
    %cst_66 = arith.constant 9.99999974E-6 : f32
    %158 = vector.broadcast %cst_66 : f32 to vector<1x8x1xf32>
    %159 = arith.addf %155, %158 : vector<1x8x1xf32>
    %160 = math.rsqrt %159 : vector<1x8x1xf32>
    %161 = vector.broadcast %160 : vector<1x8x1xf32> to vector<1x8x32xf32>
    %162 = arith.mulf %157, %161 : vector<1x8x32xf32>
    %163 = vector.shape_cast %17 : vector<1x32xf32> to vector<1x1x32xf32>
    %164 = vector.broadcast %163 : vector<1x1x32xf32> to vector<1x8x32xf32>
    %165 = arith.mulf %162, %164 : vector<1x8x32xf32>
    %166 = vector.shape_cast %19 : vector<1x32xf32> to vector<1x1x32xf32>
    %167 = vector.broadcast %166 : vector<1x1x32xf32> to vector<1x8x32xf32>
    %168 = arith.addf %165, %167 : vector<1x8x32xf32>
    %169 = arith.truncf %168 : vector<1x8x32xf32> to vector<1x8x32xbf16>
    "tpu.trace_start"() <{level = 10 : i32, message = "nld,df->nlf"}> : () -> ()
    %cst_67 = arith.constant dense<0.000000e+00> : vector<1x8x128xf32>
    %170 = tpu.matmul %169, %21, %cst_67 {dimension_numbers = #tpu.dot_dimension_numbers<[2], [0], [0, 1], [1], [0, 0, 0, 1, 1, 1], [], []>} : vector<1x8x32xbf16>, vector<32x128xbf16>, vector<1x8x128xf32> -> vector<1x8x128xf32>
    "tpu.trace_stop"() : () -> ()
    %171 = vector.shape_cast %23 : vector<1x128xf32> to vector<1x1x128xf32>
    %172 = vector.broadcast %171 : vector<1x1x128xf32> to vector<1x8x128xf32>
    %173 = arith.addf %170, %172 : vector<1x8x128xf32>
    %cst_68 = arith.constant 1.702000e+00 : f32
    %174 = vector.broadcast %cst_68 : f32 to vector<1x8x128xf32>
    %175 = arith.mulf %174, %173 : vector<1x8x128xf32>
    %176 = arith.negf %175 : vector<1x8x128xf32>
    %177 = math.exp %176 : vector<1x8x128xf32>
    %cst_69 = arith.constant 1.000000e+00 : f32
    %178 = vector.broadcast %cst_69 : f32 to vector<1x8x128xf32>
    %179 = arith.addf %178, %177 : vector<1x8x128xf32>
    %180 = arith.divf %178, %179 : vector<1x8x128xf32>
    %181 = arith.mulf %173, %180 : vector<1x8x128xf32>
    %182 = arith.truncf %181 : vector<1x8x128xf32> to vector<1x8x128xbf16>
    "tpu.trace_start"() <{level = 10 : i32, message = "nlf,fd->nld"}> : () -> ()
    %cst_70 = arith.constant dense<0.000000e+00> : vector<1x8x32xf32>
    %183 = tpu.matmul %182, %25, %cst_70 {dimension_numbers = #tpu.dot_dimension_numbers<[2], [0], [0, 1], [1], [0, 0, 0, 1, 1, 1], [], []>} : vector<1x8x128xbf16>, vector<128x32xbf16>, vector<1x8x32xf32> -> vector<1x8x32xf32>
    "tpu.trace_stop"() : () -> ()
    %184 = vector.shape_cast %27 : vector<1x32xf32> to vector<1x1x32xf32>
    %185 = vector.broadcast %184 : vector<1x1x32xf32> to vector<1x8x32xf32>
    %186 = arith.addf %183, %185 : vector<1x8x32xf32>
    %187 = arith.addf %144, %186 : vector<1x8x32xf32>
    %c0_71 = arith.constant 0 : index
    %c0_72 = arith.constant 0 : index
    %c0_73 = arith.constant 0 : index
    %188 = vector.load %arg15[%c0_71, %c0_72, %c0_73] : memref<1x8x32xf32, #tpu.memory_space<vmem>>, vector<1x8x32xf32>
    tpu.vector_store %arg15[%c0_71, %c0_72, %c0_73], %187 {strides = array<i32>} : memref<1x8x32xf32, #tpu.memory_space<vmem>>, vector<1x8x32xf32>,
    return
  }
  func.func @transform_0(%arg0: i32, %arg1: i32) -> (i32, i32, i32) {
    %c0_i32 = arith.constant 0 : i32
    %c0_i32_0 = arith.constant 0 : i32
    %c0_i32_1 = arith.constant 0 : i32
    return %arg0, %c0_i32, %c0_i32_0 : i32, i32, i32
  }
  func.func @transform_1(%arg0: i32, %arg1: i32) -> (i32, i32, i32) {
    %c0_i32 = arith.constant 0 : i32
    %c0_i32_0 = arith.constant 0 : i32
    %c0_i32_1 = arith.constant 0 : i32
    return %arg1, %c0_i32, %c0_i32_0 : i32, i32, i32
  }
  func.func @transform_2(%arg0: i32, %arg1: i32) -> (i32, i32, i32) {
    %c0_i32 = arith.constant 0 : i32
    %c0_i32_0 = arith.constant 0 : i32
    %c0_i32_1 = arith.constant 0 : i32
    return %arg1, %c0_i32, %c0_i32_0 : i32, i32, i32
  }
  func.func @transform_3(%arg0: i32, %arg1: i32) -> (i32, i32, i32) {
    %c0_i32 = arith.constant 0 : i32
    %c0_i32_0 = arith.constant 0 : i32
    %c0_i32_1 = arith.constant 0 : i32
    return %arg1, %c0_i32, %c0_i32_0 : i32, i32, i32
  }
  func.func @transform_4(%arg0: i32, %arg1: i32) -> (i32, i32, i32) {
    %c0_i32 = arith.constant 0 : i32
    %c0_i32_0 = arith.constant 0 : i32
    %c0_i32_1 = arith.constant 0 : i32
    return %arg1, %c0_i32, %c0_i32_0 : i32, i32, i32
  }
  func.func @transform_5(%arg0: i32, %arg1: i32) -> (i32, i32, i32) {
    %c0_i32 = arith.constant 0 : i32
    %c0_i32_0 = arith.constant 0 : i32
    %c0_i32_1 = arith.constant 0 : i32
    return %arg1, %c0_i32, %c0_i32_0 : i32, i32, i32
  }
  func.func @transform_6(%arg0: i32, %arg1: i32) -> (i32, i32, i32) {
    %c0_i32 = arith.constant 0 : i32
    %c0_i32_0 = arith.constant 0 : i32
    %c0_i32_1 = arith.constant 0 : i32
    return %arg1, %c0_i32, %c0_i32_0 : i32, i32, i32
  }
  func.func @transform_7(%arg0: i32, %arg1: i32) -> (i32, i32, i32) {
    %c0_i32 = arith.constant 0 : i32
    %c0_i32_0 = arith.constant 0 : i32
    %c0_i32_1 = arith.constant 0 : i32
    return %arg1, %c0_i32, %c0_i32_0 : i32, i32, i32
  }
  func.func @transform_8(%arg0: i32, %arg1: i32) -> (i32, i32, i32) {
    %c0_i32 = arith.constant 0 : i32
    %c0_i32_0 = arith.constant 0 : i32
    %c0_i32_1 = arith.constant 0 : i32
    return %arg1, %c0_i32, %c0_i32_0 : i32, i32, i32
  }
  func.func @transform_9(%arg0: i32, %arg1: i32) -> (i32, i32, i32) {
    %c0_i32 = arith.constant 0 : i32
    %c0_i32_0 = arith.constant 0 : i32
    %c0_i32_1 = arith.constant 0 : i32
    return %arg1, %c0_i32, %c0_i32_0 : i32, i32, i32
  }
  func.func @transform_10(%arg0: i32, %arg1: i32) -> (i32, i32, i32) {
    %c0_i32 = arith.constant 0 : i32
    %c0_i32_0 = arith.constant 0 : i32
    %c0_i32_1 = arith.constant 0 : i32
    return %arg1, %c0_i32, %c0_i32_0 : i32, i32, i32
  }
  func.func @transform_11(%arg0: i32, %arg1: i32) -> (i32, i32, i32) {
    %c0_i32 = arith.constant 0 : i32
    %c0_i32_0 = arith.constant 0 : i32
    %c0_i32_1 = arith.constant 0 : i32
    return %arg1, %c0_i32, %c0_i32_0 : i32, i32, i32
  }
  func.func @transform_12(%arg0: i32, %arg1: i32) -> (i32, i32, i32) {
    %c0_i32 = arith.constant 0 : i32
    %c0_i32_0 = arith.constant 0 : i32
    %c0_i32_1 = arith.constant 0 : i32
    return %arg1, %c0_i32, %c0_i32_0 : i32, i32, i32
  }
  func.func @transform_13(%arg0: i32, %arg1: i32) -> (i32, i32, i32) {
    %c0_i32 = arith.constant 0 : i32
    %c0_i32_0 = arith.constant 0 : i32
    %c0_i32_1 = arith.constant 0 : i32
    return %arg0, %c0_i32, %c0_i32_0 : i32, i32, i32
  }
}

</mosaic_0001>

<llo_original>
// kernel: transformer_forward.1
$region0: #{transformer_forward.1}
  #allocation0 [shape = 'u32[]', space=smem, size = 0x4, offset = 0x4, fixed_abs, tag = 'smem constant byte address 0x4 - core index']
  #allocation1 [shape = 'u32[72,128]{1,0:T(1,128)}', space=vmem, size = 0x9000, scoped, tag = 'internal scratch']
  %s0 = inlined_call_operand.vmem [shape: f32[2,8,32], index: 0, kind: input, shape index: {}, may-alias: {0,13}]
  %s1 = inlined_call_operand.vmem [shape: f32[2,1,32], index: 1, kind: input, shape index: {}]
  %s2 = inlined_call_operand.vmem [shape: f32[2,1,32], index: 2, kind: input, shape index: {}]
  %s3 = inlined_call_operand.vmem [shape: bf16[2,32,96], index: 3, kind: input, shape index: {}]
  %s4 = inlined_call_operand.vmem [shape: f32[2,1,96], index: 4, kind: input, shape index: {}]
  %s5 = inlined_call_operand.vmem [shape: bf16[2,32,32], index: 5, kind: input, shape index: {}]
  %s6 = inlined_call_operand.vmem [shape: f32[2,1,32], index: 6, kind: input, shape index: {}]
  %s7 = inlined_call_operand.vmem [shape: f32[2,1,32], index: 7, kind: input, shape index: {}]
  %s8 = inlined_call_operand.vmem [shape: f32[2,1,32], index: 8, kind: input, shape index: {}]
  %s9 = inlined_call_operand.vmem [shape: bf16[2,32,128], index: 9, kind: input, shape index: {}]
  %s10 = inlined_call_operand.vmem [shape: f32[2,1,128], index: 10, kind: input, shape index: {}]
  %s11 = inlined_call_operand.vmem [shape: bf16[2,128,32], index: 11, kind: input, shape index: {}]
  %s12 = inlined_call_operand.vmem [shape: f32[2,1,32], index: 12, kind: input, shape index: {}]
  %s13 = inlined_call_operand.vmem [shape: f32[2,8,32], index: 13, kind: output, shape index: {}, may-alias: {0,13}]
  %s14 = sld [smem:[#allocation0]]
  $region89: #{transformer_forward.1} parent=0
    _
  %s16 = ssub.s32 1, %s14
  %s17 = scalar_select 0, %s16, %s14
  loop: start=0, step=1, limit=6
  $region2: #{transformer_forward.1} parent=0 // loop_pre_header
    _
  $region3: #{transformer_forward.1} parent=0 // loop_header
    %s19 = sphi 0, %s23
    %p20 = scmp.ge.s32.totalorder %s19, 6
    %s26 = sphi 0, %s38
    %s27 = sphi 0, %s34
    %s28 = sphi 0, %s26
    %s29 = sphi 0, %s27
    %s30 = sphi 0, %s28
    %s31 = sphi 0, %s29
    %s41 = sphi 0, %s43
    %s44 = sphi 0, %s41
    %s45 = sphi 0, %s44
    %s61 = sphi 0, %s45
    %s67 = sphi 0, %s69
    %s70 = sphi 0, %s67
    %s71 = sphi 0, %s70
    %s87 = sphi 0, %s71
    %s93 = sphi 0, %s95
    %s96 = sphi 0, %s93
    %s97 = sphi 0, %s96
    %s113 = sphi 0, %s97
    %s119 = sphi 0, %s121
    %s122 = sphi 0, %s119
    %s123 = sphi 0, %s122
    %s139 = sphi 0, %s123
    %s145 = sphi 0, %s147
    %s148 = sphi 0, %s145
    %s149 = sphi 0, %s148
    %s165 = sphi 0, %s149
    %s171 = sphi 0, %s173
    %s174 = sphi 0, %s171
    %s175 = sphi 0, %s174
    %s191 = sphi 0, %s175
    %s197 = sphi 0, %s199
    %s200 = sphi 0, %s197
    %s201 = sphi 0, %s200
    %s217 = sphi 0, %s201
    %s223 = sphi 0, %s225
    %s226 = sphi 0, %s223
    %s227 = sphi 0, %s226
    %s243 = sphi 0, %s227
    %s249 = sphi 0, %s251
    %s252 = sphi 0, %s249
    %s253 = sphi 0, %s252
    %s269 = sphi 0, %s253
    %s275 = sphi 0, %s277
    %s278 = sphi 0, %s275
    %s279 = sphi 0, %s278
    %s295 = sphi 0, %s279
    %s301 = sphi 0, %s303
    %s304 = sphi 0, %s301
    %s305 = sphi 0, %s304
    %s321 = sphi 0, %s305
    %s327 = sphi 0, %s329
    %s330 = sphi 0, %s327
    %s331 = sphi 0, %s330
    %s347 = sphi 0, %s331
    %s353 = sphi 0, %s355
    %s356 = sphi 0, %s353
    %s357 = sphi 0, %s356
    %s373 = sphi 0, %s357
    %s379 = sphi 0, %s381
    %s382 = sphi 0, %s379
    %s383 = sphi 0, %s382
    %s399 = sphi 0, %s383
  $region4: #{transformer_forward.1} parent=0 // loop_header_branch
    %22 = sbr.rel (%p20) target = $region8
  $region5: #{transformer_forward.1} parent=0 // loop_body
    %s24 = ssub.s32 %s19, 1
    %s25 = ssub.s32 %s19, 2
    %s32 = sadd.s32 1, %s27
    %p33 = scmp.ge.s32.totalorder %s32, 2
    %s34 = scalar_select %p33, 0, %s32
    %s35 = sadd.s32 1, %s26
    %s36 = scalar_select %p33, %s35, %s26
    %p37 = scmp.ge.s32.totalorder %s36, 2
    %s38 = scalar_select %p37, 0, %s36
    %s39 = ssub.s32 %s26, %s38
    %p40 = scmp.eq.s32.totalorder %s39, 0
    %s42 = sadd.s32 %s41, 1
    %s43 = scalar_select %p40, %s41, %s42
    %p46 = pneg %p40
    %p47 = scmp.eq.s32.totalorder %s19, 3
    %p48 = por %p46, %p47
    %p49 = scmp.ne.s32.totalorder %s41, %s44
    %p50 = scmp.eq.s32.totalorder %s19, 0
    %p51 = por %p49, %p50
    %p52 = scmp.ne.s32.totalorder %s41, %s44
    %p53 = scmp.eq.s32.totalorder %s24, 3
    %p54 = por %p52, %p53
    %p55 = scmp.ne.s32.totalorder %s44, %s45
    %p56 = scmp.eq.s32.totalorder %s24, 0
    %p57 = por %p55, %p56
    %p58 = scmp.ne.s32.totalorder %s44, %s45
    %p59 = scmp.eq.s32.totalorder %s25, 3
    %p60 = por %p58, %p59
    %p62 = scmp.ne.s32.totalorder %s45, %s61
    %p63 = scmp.eq.s32.totalorder %s25, 0
    %p64 = por %p62, %p63
    %s65 = ssub.s32 %s27, %s34
    %p66 = scmp.eq.s32.totalorder %s65, 0
    %s68 = sadd.s32 %s67, 1
    %s69 = scalar_select %p66, %s67, %s68
    %p72 = pneg %p66
    %p73 = scmp.eq.s32.totalorder %s19, 3
    %p74 = por %p72, %p73
    %p75 = scmp.ne.s32.totalorder %s67, %s70
    %p76 = scmp.eq.s32.totalorder %s19, 0
    %p77 = por %p75, %p76
    %p78 = scmp.ne.s32.totalorder %s67, %s70
    %p79 = scmp.eq.s32.totalorder %s24, 3
    %p80 = por %p78, %p79
    %p81 = scmp.ne.s32.totalorder %s70, %s71
    %p82 = scmp.eq.s32.totalorder %s24, 0
    %p83 = por %p81, %p82
    %p84 = scmp.ne.s32.totalorder %s70, %s71
    %p85 = scmp.eq.s32.totalorder %s25, 3
    %p86 = por %p84, %p85
    %p88 = scmp.ne.s32.totalorder %s71, %s87
    %p89 = scmp.eq.s32.totalorder %s25, 0
    %p90 = por %p88, %p89
    %s91 = ssub.s32 %s27, %s34
    %p92 = scmp.eq.s32.totalorder %s91, 0
    %s94 = sadd.s32 %s93, 1
    %s95 = scalar_select %p92, %s93, %s94
    %p98 = pneg %p92
    %p99 = scmp.eq.s32.totalorder %s19, 3
    %p100 = por %p98, %p99
    %p101 = scmp.ne.s32.totalorder %s93, %s96
    %p102 = scmp.eq.s32.totalorder %s19, 0
    %p103 = por %p101, %p102
    %p104 = scmp.ne.s32.totalorder %s93, %s96
    %p105 = scmp.eq.s32.totalorder %s24, 3
    %p106 = por %p104, %p105
    %p107 = scmp.ne.s32.totalorder %s96, %s97
    %p108 = scmp.eq.s32.totalorder %s24, 0
    %p109 = por %p107, %p108
    %p110 = scmp.ne.s32.totalorder %s96, %s97
    %p111 = scmp.eq.s32.totalorder %s25, 3
    %p112 = por %p110, %p111
    %p114 = scmp.ne.s32.totalorder %s97, %s113
    %p115 = scmp.eq.s32.totalorder %s25, 0
    %p116 = por %p114, %p115
    %s117 = ssub.s32 %s27, %s34
    %p118 = scmp.eq.s32.totalorder %s117, 0
    %s120 = sadd.s32 %s119, 1
    %s121 = scalar_select %p118, %s119, %s120
    %p124 = pneg %p118
    %p125 = scmp.eq.s32.totalorder %s19, 3
    %p126 = por %p124, %p125
    %p127 = scmp.ne.s32.totalorder %s119, %s122
    %p128 = scmp.eq.s32.totalorder %s19, 0
    %p129 = por %p127, %p128
    %p130 = scmp.ne.s32.totalorder %s119, %s122
    %p131 = scmp.eq.s32.totalorder %s24, 3
    %p132 = por %p130, %p131
    %p133 = scmp.ne.s32.totalorder %s122, %s123
    %p134 = scmp.eq.s32.totalorder %s24, 0
    %p135 = por %p133, %p134
    %p136 = scmp.ne.s32.totalorder %s122, %s123
    %p137 = scmp.eq.s32.totalorder %s25, 3
    %p138 = por %p136, %p137
    %p140 = scmp.ne.s32.totalorder %s123, %s139
    %p141 = scmp.eq.s32.totalorder %s25, 0
    %p142 = por %p140, %p141
    %s143 = ssub.s32 %s27, %s34
    %p144 = scmp.eq.s32.totalorder %s143, 0
    %s146 = sadd.s32 %s145, 1
    %s147 = scalar_select %p144, %s145, %s146
    %p150 = pneg %p144
    %p151 = scmp.eq.s32.totalorder %s19, 3
    %p152 = por %p150, %p151
    %p153 = scmp.ne.s32.totalorder %s145, %s148
    %p154 = scmp.eq.s32.totalorder %s19, 0
    %p155 = por %p153, %p154
    %p156 = scmp.ne.s32.totalorder %s145, %s148
    %p157 = scmp.eq.s32.totalorder %s24, 3
    %p158 = por %p156, %p157
    %p159 = scmp.ne.s32.totalorder %s148, %s149
    %p160 = scmp.eq.s32.totalorder %s24, 0
    %p161 = por %p159, %p160
    %p162 = scmp.ne.s32.totalorder %s148, %s149
    %p163 = scmp.eq.s32.totalorder %s25, 3
    %p164 = por %p162, %p163
    %p166 = scmp.ne.s32.totalorder %s149, %s165
    %p167 = scmp.eq.s32.totalorder %s25, 0
    %p168 = por %p166, %p167
    %s169 = ssub.s32 %s27, %s34
    %p170 = scmp.eq.s32.totalorder %s169, 0
    %s172 = sadd.s32 %s171, 1
    %s173 = scalar_select %p170, %s171, %s172
    %p176 = pneg %p170
    %p177 = scmp.eq.s32.totalorder %s19, 3
    %p178 = por %p176, %p177
    %p179 = scmp.ne.s32.totalorder %s171, %s174
    %p180 = scmp.eq.s32.totalorder %s19, 0
    %p181 = por %p179, %p180
    %p182 = scmp.ne.s32.totalorder %s171, %s174
    %p183 = scmp.eq.s32.totalorder %s24, 3
    %p184 = por %p182, %p183
    %p185 = scmp.ne.s32.totalorder %s174, %s175
    %p186 = scmp.eq.s32.totalorder %s24, 0
    %p187 = por %p185, %p186
    %p188 = scmp.ne.s32.totalorder %s174, %s175
    %p189 = scmp.eq.s32.totalorder %s25, 3
    %p190 = por %p188, %p189
    %p192 = scmp.ne.s32.totalorder %s175, %s191
    %p193 = scmp.eq.s32.totalorder %s25, 0
    %p194 = por %p192, %p193
    %s195 = ssub.s32 %s27, %s34
    %p196 = scmp.eq.s32.totalorder %s195, 0
    %s198 = sadd.s32 %s197, 1
    %s199 = scalar_select %p196, %s197, %s198
    %p202 = pneg %p196
    %p203 = scmp.eq.s32.totalorder %s19, 3
    %p204 = por %p202, %p203
    %p205 = scmp.ne.s32.totalorder %s197, %s200
    %p206 = scmp.eq.s32.totalorder %s19, 0
    %p207 = por %p205, %p206
    %p208 = scmp.ne.s32.totalorder %s197, %s200
    %p209 = scmp.eq.s32.totalorder %s24, 3
    %p210 = por %p208, %p209
    %p211 = scmp.ne.s32.totalorder %s200, %s201
    %p212 = scmp.eq.s32.totalorder %s24, 0
    %p213 = por %p211, %p212
    %p214 = scmp.ne.s32.totalorder %s200, %s201
    %p215 = scmp.eq.s32.totalorder %s25, 3
    %p216 = por %p214, %p215
    %p218 = scmp.ne.s32.totalorder %s201, %s217
    %p219 = scmp.eq.s32.totalorder %s25, 0
    %p220 = por %p218, %p219
    %s221 = ssub.s32 %s27, %s34
    %p222 = scmp.eq.s32.totalorder %s221, 0
    %s224 = sadd.s32 %s223, 1
    %s225 = scalar_select %p222, %s223, %s224
    %p228 = pneg %p222
    %p229 = scmp.eq.s32.totalorder %s19, 3
    %p230 = por %p228, %p229
    %p231 = scmp.ne.s32.totalorder %s223, %s226
    %p232 = scmp.eq.s32.totalorder %s19, 0
    %p233 = por %p231, %p232
    %p234 = scmp.ne.s32.totalorder %s223, %s226
    %p235 = scmp.eq.s32.totalorder %s24, 3
    %p236 = por %p234, %p235
    %p237 = scmp.ne.s32.totalorder %s226, %s227
    %p238 = scmp.eq.s32.totalorder %s24, 0
    %p239 = por %p237, %p238
    %p240 = scmp.ne.s32.totalorder %s226, %s227
    %p241 = scmp.eq.s32.totalorder %s25, 3
    %p242 = por %p240, %p241
    %p244 = scmp.ne.s32.totalorder %s227, %s243
    %p245 = scmp.eq.s32.totalorder %s25, 0
    %p246 = por %p244, %p245
    %s247 = ssub.s32 %s27, %s34
    %p248 = scmp.eq.s32.totalorder %s247, 0
    %s250 = sadd.s32 %s249, 1
    %s251 = scalar_select %p248, %s249, %s250
    %p254 = pneg %p248
    %p255 = scmp.eq.s32.totalorder %s19, 3
    %p256 = por %p254, %p255
    %p257 = scmp.ne.s32.totalorder %s249, %s252
    %p258 = scmp.eq.s32.totalorder %s19, 0
    %p259 = por %p257, %p258
    %p260 = scmp.ne.s32.totalorder %s249, %s252
    %p261 = scmp.eq.s32.totalorder %s24, 3
    %p262 = por %p260, %p261
    %p263 = scmp.ne.s32.totalorder %s252, %s253
    %p264 = scmp.eq.s32.totalorder %s24, 0
    %p265 = por %p263, %p264
    %p266 = scmp.ne.s32.totalorder %s252, %s253
    %p267 = scmp.eq.s32.totalorder %s25, 3
    %p268 = por %p266, %p267
    %p270 = scmp.ne.s32.totalorder %s253, %s269
    %p271 = scmp.eq.s32.totalorder %s25, 0
    %p272 = por %p270, %p271
    %s273 = ssub.s32 %s27, %s34
    %p274 = scmp.eq.s32.totalorder %s273, 0
    %s276 = sadd.s32 %s275, 1
    %s277 = scalar_select %p274, %s275, %s276
    %p280 = pneg %p274
    %p281 = scmp.eq.s32.totalorder %s19, 3
    %p282 = por %p280, %p281
    %p283 = scmp.ne.s32.totalorder %s275, %s278
    %p284 = scmp.eq.s32.totalorder %s19, 0
    %p285 = por %p283, %p284
    %p286 = scmp.ne.s32.totalorder %s275, %s278
    %p287 = scmp.eq.s32.totalorder %s24, 3
    %p288 = por %p286, %p287
    %p289 = scmp.ne.s32.totalorder %s278, %s279
    %p290 = scmp.eq.s32.totalorder %s24, 0
    %p291 = por %p289, %p290
    %p292 = scmp.ne.s32.totalorder %s278, %s279
    %p293 = scmp.eq.s32.totalorder %s25, 3
    %p294 = por %p292, %p293
    %p296 = scmp.ne.s32.totalorder %s279, %s295
    %p297 = scmp.eq.s32.totalorder %s25, 0
    %p298 = por %p296, %p297
    %s299 = ssub.s32 %s27, %s34
    %p300 = scmp.eq.s32.totalorder %s299, 0
    %s302 = sadd.s32 %s301, 1
    %s303 = scalar_select %p300, %s301, %s302
    %p306 = pneg %p300
    %p307 = scmp.eq.s32.totalorder %s19, 3
    %p308 = por %p306, %p307
    %p309 = scmp.ne.s32.totalorder %s301, %s304
    %p310 = scmp.eq.s32.totalorder %s19, 0
    %p311 = por %p309, %p310
    %p312 = scmp.ne.s32.totalorder %s301, %s304
    %p313 = scmp.eq.s32.totalorder %s24, 3
    %p314 = por %p312, %p313
    %p315 = scmp.ne.s32.totalorder %s304, %s305
    %p316 = scmp.eq.s32.totalorder %s24, 0
    %p317 = por %p315, %p316
    %p318 = scmp.ne.s32.totalorder %s304, %s305
    %p319 = scmp.eq.s32.totalorder %s25, 3
    %p320 = por %p318, %p319
    %p322 = scmp.ne.s32.totalorder %s305, %s321
    %p323 = scmp.eq.s32.totalorder %s25, 0
    %p324 = por %p322, %p323
    %s325 = ssub.s32 %s27, %s34
    %p326 = scmp.eq.s32.totalorder %s325, 0
    %s328 = sadd.s32 %s327, 1
    %s329 = scalar_select %p326, %s327, %s328
    %p332 = pneg %p326
    %p333 = scmp.eq.s32.totalorder %s19, 3
    %p334 = por %p332, %p333
    %p335 = scmp.ne.s32.totalorder %s327, %s330
    %p336 = scmp.eq.s32.totalorder %s19, 0
    %p337 = por %p335, %p336
    %p338 = scmp.ne.s32.totalorder %s327, %s330
    %p339 = scmp.eq.s32.totalorder %s24, 3
    %p340 = por %p338, %p339
    %p341 = scmp.ne.s32.totalorder %s330, %s331
    %p342 = scmp.eq.s32.totalorder %s24, 0
    %p343 = por %p341, %p342
    %p344 = scmp.ne.s32.totalorder %s330, %s331
    %p345 = scmp.eq.s32.totalorder %s25, 3
    %p346 = por %p344, %p345
    %p348 = scmp.ne.s32.totalorder %s331, %s347
    %p349 = scmp.eq.s32.totalorder %s25, 0
    %p350 = por %p348, %p349
    %s351 = ssub.s32 %s27, %s34
    %p352 = scmp.eq.s32.totalorder %s351, 0
    %s354 = sadd.s32 %s353, 1
    %s355 = scalar_select %p352, %s353, %s354
    %p358 = pneg %p352
    %p359 = scmp.eq.s32.totalorder %s19, 3
    %p360 = por %p358, %p359
    %p361 = scmp.ne.s32.totalorder %s353, %s356
    %p362 = scmp.eq.s32.totalorder %s19, 0
    %p363 = por %p361, %p362
    %p364 = scmp.ne.s32.totalorder %s353, %s356
    %p365 = scmp.eq.s32.totalorder %s24, 3
    %p366 = por %p364, %p365
    %p367 = scmp.ne.s32.totalorder %s356, %s357
    %p368 = scmp.eq.s32.totalorder %s24, 0
    %p369 = por %p367, %p368
    %p370 = scmp.ne.s32.totalorder %s356, %s357
    %p371 = scmp.eq.s32.totalorder %s25, 3
    %p372 = por %p370, %p371
    %p374 = scmp.ne.s32.totalorder %s357, %s373
    %p375 = scmp.eq.s32.totalorder %s25, 0
    %p376 = por %p374, %p375
    %s377 = ssub.s32 %s26, %s38
    %p378 = scmp.eq.s32.totalorder %s377, 0
    %s380 = sadd.s32 %s379, 1
    %s381 = scalar_select %p378, %s379, %s380
    %p384 = pneg %p378
    %p385 = scmp.eq.s32.totalorder %s19, 3
    %p386 = por %p384, %p385
    %p387 = scmp.ne.s32.totalorder %s379, %s382
    %p388 = scmp.eq.s32.totalorder %s19, 0
    %p389 = por %p387, %p388
    %p390 = scmp.ne.s32.totalorder %s379, %s382
    %p391 = scmp.eq.s32.totalorder %s24, 3
    %p392 = por %p390, %p391
    %p393 = scmp.ne.s32.totalorder %s382, %s383
    %p394 = scmp.eq.s32.totalorder %s24, 0
    %p395 = por %p393, %p394
    %p396 = scmp.ne.s32.totalorder %s382, %s383
    %p397 = scmp.eq.s32.totalorder %s25, 3
    %p398 = por %p396, %p397
    %p400 = scmp.ne.s32.totalorder %s383, %s399
    %p401 = scmp.eq.s32.totalorder %s25, 0
    %p402 = por %p400, %p401
    %p403 = scmp.le.s32.totalorder 1, %s19
    %p404 = scmp.lt.s32.totalorder %s19, 5
    %p405 = pnand %p403, %p404
    %p406 = pneg %p405
    // Predicated region
    $region9: #{transformer_forward.1} parent=5 // pred_check
      _
    $region10: #{transformer_forward.1} parent=5 // pred_check_branch
      %408 = sbr.rel (%p405) target = $region12
    $region11: #{transformer_forward.1} parent=5 // pred_region
      %s409 = ssub.s32 %s19, 1
    $region12: #{transformer_forward.1} parent=5 // pred_fallthru
      _
    %p410 = scmp.lt.s32.totalorder %s19, 4
    // Predicated region
    $region13: #{transformer_forward.1} parent=5 // pred_check
      %p411 = pneg %p410
    $region14: #{transformer_forward.1} parent=5 // pred_check_branch
      %413 = sbr.rel (%p411) target = $region16
    $region15: #{transformer_forward.1} parent=5 // pred_region
      // Predicated region
      $region17: #{transformer_forward.1} parent=15 // pred_check
        %p414 = pneg %p51
      $region18: #{transformer_forward.1} parent=15 // pred_check_branch
        %416 = sbr.rel (%p414) target = $region20
      $region19: #{transformer_forward.1} parent=15 // pred_region
        %p417 = scmp.lt.s32.totalorder %s26, 1
        %s418 = scalar_select %p417, %s26, 1
        %s419 = smul.addr %s418, 8
        %s420 = scalar_lea.vmem %s0, %s419
      $region20: #{transformer_forward.1} parent=15 // pred_fallthru
        _
      // Predicated region
      $region21: #{transformer_forward.1} parent=15 // pred_check
        %p421 = pneg %p77
      $region22: #{transformer_forward.1} parent=15 // pred_check_branch
        %423 = sbr.rel (%p421) target = $region24
      $region23: #{transformer_forward.1} parent=15 // pred_region
        %p424 = scmp.lt.s32.totalorder %s27, 1
        %s425 = scalar_select %p424, %s27, 1
        %s426 = scalar_lea.vmem %s1, %s425
      $region24: #{transformer_forward.1} parent=15 // pred_fallthru
        _
      // Predicated region
      $region25: #{transformer_forward.1} parent=15 // pred_check
        %p427 = pneg %p103
      $region26: #{transformer_forward.1} parent=15 // pred_check_branch
        %429 = sbr.rel (%p427) target = $region28
      $region27: #{transformer_forward.1} parent=15 // pred_region
        %p430 = scmp.lt.s32.totalorder %s27, 1
        %s431 = scalar_select %p430, %s27, 1
        %s432 = scalar_lea.vmem %s2, %s431
      $region28: #{transformer_forward.1} parent=15 // pred_fallthru
        _
      // Predicated region
      $region29: #{transformer_forward.1} parent=15 // pred_check
        %p433 = pneg %p129
      $region30: #{transformer_forward.1} parent=15 // pred_check_branch
        %435 = sbr.rel (%p433) target = $region32
      $region31: #{transformer_forward.1} parent=15 // pred_region
        %p436 = scmp.lt.s32.totalorder %s27, 1
        %s437 = scalar_select %p436, %s27, 1
        %s438 = smul.addr %s437, 4
        %s439 = smul.addr %s438, 4
        %s440 = scalar_lea.vmem %s3, %s439
      $region32: #{transformer_forward.1} parent=15 // pred_fallthru
        _
      // Predicated region
      $region33: #{transformer_forward.1} parent=15 // pred_check
        %p441 = pneg %p155
      $region34: #{transformer_forward.1} parent=15 // pred_check_branch
        %443 = sbr.rel (%p441) target = $region36
      $region35: #{transformer_forward.1} parent=15 // pred_region
        %p444 = scmp.lt.s32.totalorder %s27, 1
        %s445 = scalar_select %p444, %s27, 1
        %s446 = scalar_lea.vmem %s4, %s445
      $region36: #{transformer_forward.1} parent=15 // pred_fallthru
        _
      // Predicated region
      $region37: #{transformer_forward.1} parent=15 // pred_check
        %p447 = pneg %p181
      $region38: #{transformer_forward.1} parent=15 // pred_check_branch
        %449 = sbr.rel (%p447) target = $region40
      $region39: #{transformer_forward.1} parent=15 // pred_region
        %p450 = scmp.lt.s32.totalorder %s27, 1
        %s451 = scalar_select %p450, %s27, 1
        %s452 = smul.addr %s451, 4
        %s453 = smul.addr %s452, 4
        %s454 = scalar_lea.vmem %s5, %s453
      $region40: #{transformer_forward.1} parent=15 // pred_fallthru
        _
      // Predicated region
      $region41: #{transformer_forward.1} parent=15 // pred_check
        %p455 = pneg %p207
      $region42: #{transformer_forward.1} parent=15 // pred_check_branch
        %457 = sbr.rel (%p455) target = $region44
      $region43: #{transformer_forward.1} parent=15 // pred_region
        %p458 = scmp.lt.s32.totalorder %s27, 1
        %s459 = scalar_select %p458, %s27, 1
        %s460 = scalar_lea.vmem %s6, %s459
      $region44: #{transformer_forward.1} parent=15 // pred_fallthru
        _
      // Predicated region
      $region45: #{transformer_forward.1} parent=15 // pred_check
        %p461 = pneg %p233
      $region46: #{transformer_forward.1} parent=15 // pred_check_branch
        %463 = sbr.rel (%p461) target = $region48
      $region47: #{transformer_forward.1} parent=15 // pred_region
        %p464 = scmp.lt.s32.totalorder %s27, 1
        %s465 = scalar_select %p464, %s27, 1
        %s466 = scalar_lea.vmem %s7, %s465
      $region48: #{transformer_forward.1} parent=15 // pred_fallthru
        _
      // Predicated region
      $region49: #{transformer_forward.1} parent=15 // pred_check
        %p467 = pneg %p259
      $region50: #{transformer_forward.1} parent=15 // pred_check_branch
        %469 = sbr.rel (%p467) target = $region52
      $region51: #{transformer_forward.1} parent=15 // pred_region
        %p470 = scmp.lt.s32.totalorder %s27, 1
        %s471 = scalar_select %p470, %s27, 1
        %s472 = scalar_lea.vmem %s8, %s471
      $region52: #{transformer_forward.1} parent=15 // pred_fallthru
        _
      // Predicated region
      $region53: #{transformer_forward.1} parent=15 // pred_check
        %p473 = pneg %p285
      $region54: #{transformer_forward.1} parent=15 // pred_check_branch
        %475 = sbr.rel (%p473) target = $region56
      $region55: #{transformer_forward.1} parent=15 // pred_region
        %p476 = scmp.lt.s32.totalorder %s27, 1
        %s477 = scalar_select %p476, %s27, 1
        %s478 = smul.addr %s477, 4
        %s479 = smul.addr %s478, 4
        %s480 = scalar_lea.vmem %s9, %s479
      $region56: #{transformer_forward.1} parent=15 // pred_fallthru
        _
      // Predicated region
      $region57: #{transformer_forward.1} parent=15 // pred_check
        %p481 = pneg %p311
      $region58: #{transformer_forward.1} parent=15 // pred_check_branch
        %483 = sbr.rel (%p481) target = $region60
      $region59: #{transformer_forward.1} parent=15 // pred_region
        %p484 = scmp.lt.s32.totalorder %s27, 1
        %s485 = scalar_select %p484, %s27, 1
        %s486 = scalar_lea.vmem %s10, %s485
      $region60: #{transformer_forward.1} parent=15 // pred_fallthru
        _
      // Predicated region
      $region61: #{transformer_forward.1} parent=15 // pred_check
        %p487 = pneg %p337
      $region62: #{transformer_forward.1} parent=15 // pred_check_branch
        %489 = sbr.rel (%p487) target = $region64
      $region63: #{transformer_forward.1} parent=15 // pred_region
        %p490 = scmp.lt.s32.totalorder %s27, 1
        %s491 = scalar_select %p490, %s27, 1
        %s492 = smul.addr %s491, 16
        %s493 = smul.addr %s492, 4
        %s494 = scalar_lea.vmem %s11, %s493
      $region64: #{transformer_forward.1} parent=15 // pred_fallthru
        _
      // Predicated region
      $region65: #{transformer_forward.1} parent=15 // pred_check
        %p495 = pneg %p363
      $region66: #{transformer_forward.1} parent=15 // pred_check_branch
        %497 = sbr.rel (%p495) target = $region68
      $region67: #{transformer_forward.1} parent=15 // pred_region
        %p498 = scmp.lt.s32.totalorder %s27, 1
        %s499 = scalar_select %p498, %s27, 1
        %s500 = scalar_lea.vmem %s12, %s499
      $region68: #{transformer_forward.1} parent=15 // pred_fallthru
        _
    $region16: #{transformer_forward.1} parent=5 // pred_fallthru
      _
    %p501 = scmp.le.s32.totalorder 1, %s19
    %p502 = scmp.lt.s32.totalorder %s19, 5
    %p503 = pnand %p501, %p502
    %p504 = pneg %p503
    // Predicated region
    $region69: #{transformer_forward.1} parent=5 // pred_check
      _
    $region70: #{transformer_forward.1} parent=5 // pred_check_branch
      %506 = sbr.rel (%p503) target = $region72
    $region71: #{transformer_forward.1} parent=5 // pred_region
      %s507 = ssub.s32 %s19, 1
      %p508 = scmp.lt.s32.totalorder %s28, 1
      %s509 = scalar_select %p508, %s28, 1
      %s510 = smul.addr %s509, 8
      %s511 = scalar_lea.vmem %s0, %s510
      %p512 = pneg %p57
      %p513 = pneg %p54
      %p514 = scmp.lt.s32.totalorder %s29, 1
      %s515 = scalar_select %p514, %s29, 1
      %s516 = scalar_lea.vmem %s1, %s515
      %p517 = pneg %p83
      %p518 = pneg %p80
      %p519 = scmp.lt.s32.totalorder %s29, 1
      %s520 = scalar_select %p519, %s29, 1
      %s521 = scalar_lea.vmem %s2, %s520
      %p522 = pneg %p109
      %p523 = pneg %p106
      %p524 = scmp.lt.s32.totalorder %s29, 1
      %s525 = scalar_select %p524, %s29, 1
      %s526 = smul.addr %s525, 4
      %s527 = smul.addr %s526, 4
      %s528 = scalar_lea.vmem %s3, %s527
      %p529 = pneg %p135
      %p530 = pneg %p132
      %p531 = scmp.lt.s32.totalorder %s29, 1
      %s532 = scalar_select %p531, %s29, 1
      %s533 = scalar_lea.vmem %s4, %s532
      %p534 = pneg %p161
      %p535 = pneg %p158
      %p536 = scmp.lt.s32.totalorder %s29, 1
      %s537 = scalar_select %p536, %s29, 1
      %s538 = smul.addr %s537, 4
      %s539 = smul.addr %s538, 4
      %s540 = scalar_lea.vmem %s5, %s539
      %p541 = pneg %p187
      %p542 = pneg %p184
      %p543 = scmp.lt.s32.totalorder %s29, 1
      %s544 = scalar_select %p543, %s29, 1
      %s545 = scalar_lea.vmem %s6, %s544
      %p546 = pneg %p213
      %p547 = pneg %p210
      %p548 = scmp.lt.s32.totalorder %s29, 1
      %s549 = scalar_select %p548, %s29, 1
      %s550 = scalar_lea.vmem %s7, %s549
      %p551 = pneg %p239
      %p552 = pneg %p236
      %p553 = scmp.lt.s32.totalorder %s29, 1
      %s554 = scalar_select %p553, %s29, 1
      %s555 = scalar_lea.vmem %s8, %s554
      %p556 = pneg %p265
      %p557 = pneg %p262
      %p558 = scmp.lt.s32.totalorder %s29, 1
      %s559 = scalar_select %p558, %s29, 1
      %s560 = smul.addr %s559, 4
      %s561 = smul.addr %s560, 4
      %s562 = scalar_lea.vmem %s9, %s561
      %p563 = pneg %p291
      %p564 = pneg %p288
      %p565 = scmp.lt.s32.totalorder %s29, 1
      %s566 = scalar_select %p565, %s29, 1
      %s567 = scalar_lea.vmem %s10, %s566
      %p568 = pneg %p317
      %p569 = pneg %p314
      %p570 = scmp.lt.s32.totalorder %s29, 1
      %s571 = scalar_select %p570, %s29, 1
      %s572 = smul.addr %s571, 16
      %s573 = smul.addr %s572, 4
      %s574 = scalar_lea.vmem %s11, %s573
      %p575 = pneg %p343
      %p576 = pneg %p340
      %p577 = scmp.lt.s32.totalorder %s29, 1
      %s578 = scalar_select %p577, %s29, 1
      %s579 = scalar_lea.vmem %s12, %s578
      %p580 = pneg %p369
      %p581 = pneg %p366
      %p582 = pneg %p395
      %p583 = pneg %p392
      %p584 = scmp.lt.s32.totalorder %s28, 1
      %s585 = scalar_select %p584, %s28, 1
      %s586 = smul.addr %s585, 8
      %s587 = scalar_lea.vmem %s13, %s586
      %p588 = scmp.lt.s32.totalorder %s28, 1
      %s589 = scalar_select %p588, %s28, 1
      %s590 = smul.addr %s589, 8
      %s591 = scalar_lea.vmem %s0, %s590
      %p592 = scmp.lt.s32.totalorder %s29, 1
      %s593 = scalar_select %p592, %s29, 1
      %s594 = scalar_lea.vmem %s1, %s593
      %p595 = scmp.lt.s32.totalorder %s29, 1
      %s596 = scalar_select %p595, %s29, 1
      %s597 = scalar_lea.vmem %s2, %s596
      %p598 = scmp.lt.s32.totalorder %s29, 1
      %s599 = scalar_select %p598, %s29, 1
      %s600 = smul.addr %s599, 4
      %s601 = smul.addr %s600, 4
      %s602 = scalar_lea.vmem %s3, %s601
      %p603 = scmp.lt.s32.totalorder %s29, 1
      %s604 = scalar_select %p603, %s29, 1
      %s605 = scalar_lea.vmem %s4, %s604
      %p606 = scmp.lt.s32.totalorder %s29, 1
      %s607 = scalar_select %p606, %s29, 1
      %s608 = smul.addr %s607, 4
      %s609 = smul.addr %s608, 4
      %s610 = scalar_lea.vmem %s5, %s609
      %p611 = scmp.lt.s32.totalorder %s29, 1
      %s612 = scalar_select %p611, %s29, 1
      %s613 = scalar_lea.vmem %s6, %s612
      %p614 = scmp.lt.s32.totalorder %s29, 1
      %s615 = scalar_select %p614, %s29, 1
      %s616 = scalar_lea.vmem %s7, %s615
      %p617 = scmp.lt.s32.totalorder %s29, 1
      %s618 = scalar_select %p617, %s29, 1
      %s619 = scalar_lea.vmem %s8, %s618
      %p620 = scmp.lt.s32.totalorder %s29, 1
      %s621 = scalar_select %p620, %s29, 1
      %s622 = smul.addr %s621, 4
      %s623 = smul.addr %s622, 4
      %s624 = scalar_lea.vmem %s9, %s623
      %p625 = scmp.lt.s32.totalorder %s29, 1
      %s626 = scalar_select %p625, %s29, 1
      %s627 = scalar_lea.vmem %s10, %s626
      %p628 = scmp.lt.s32.totalorder %s29, 1
      %s629 = scalar_select %p628, %s29, 1
      %s630 = smul.addr %s629, 16
      %s631 = smul.addr %s630, 4
      %s632 = scalar_lea.vmem %s11, %s631
      %p633 = scmp.lt.s32.totalorder %s29, 1
      %s634 = scalar_select %p633, %s29, 1
      %s635 = scalar_lea.vmem %s12, %s634
      %p636 = scmp.lt.s32.totalorder %s28, 1
      %s637 = scalar_select %p636, %s28, 1
      %s638 = smul.addr %s637, 8
      %s639 = scalar_lea.vmem %s13, %s638
      %p641 = scmp.eq.s32.totalorder %s29, 0
      // Predicated region
      $region73: #{transformer_forward.1} parent=71 // pred_check
        %p642 = pneg %p641
      $region74: #{transformer_forward.1} parent=71 // pred_check_branch
        %644 = sbr.rel (%p642) target = $region76
      $region75: #{transformer_forward.1} parent=71 // pred_region
        %v645 = vld [vmem:[%s591] sm:$0xff]
        %vm646 = vcmask 261120
        %647 = vst.msk [vmem:[%s639] sm:$0xff] %vm646, %v645
      $region76: #{transformer_forward.1} parent=71 // pred_fallthru
        _
      %v648 = vld [vmem:[%s639] sm:$0xff]
      %v649 = vld [vmem:[%s594] sm:$0x1]
      %v650 = vld [vmem:[%s597] sm:$0x1]
      %v651 = vld [vmem:[%s602] sm:$0xf]
      %v652 = vld [vmem:[%s602 + $0x4] sm:$0xf]
      %v653 = vld [vmem:[%s602 + $0x8] sm:$0xf]
      %v654 = vld [vmem:[%s602 + $0xc] sm:$0xf]
      %v655 = vld [vmem:[%s605] sm:$0x1]
      %v656 = vld [vmem:[%s610] sm:$0xf]
      %v657 = vld [vmem:[%s610 + $0x4] sm:$0xf]
      %v658 = vld [vmem:[%s610 + $0x8] sm:$0xf]
      %v659 = vld [vmem:[%s610 + $0xc] sm:$0xf]
      %v660 = vld [vmem:[%s613] sm:$0x1]
      %v661 = vld [vmem:[%s616] sm:$0x1]
      %v662 = vld [vmem:[%s619] sm:$0x1]
      %v663 = vld [vmem:[%s624] sm:$0xf]
      %v664 = vld [vmem:[%s624 + $0x4] sm:$0xf]
      %v665 = vld [vmem:[%s624 + $0x8] sm:$0xf]
      %v666 = vld [vmem:[%s624 + $0xc] sm:$0xf]
      %v667 = vld [vmem:[%s627] sm:$0x1]
      %v668 = vld [vmem:[%s632] sm:$0xf]
      %v669 = vld [vmem:[%s632 + $0x4] sm:$0xf]
      %v670 = vld [vmem:[%s632 + $0x8] sm:$0xf]
      %v671 = vld [vmem:[%s632 + $0xc] sm:$0xf]
      %v672 = vld [vmem:[%s632 + $0x10] sm:$0xf]
      %v673 = vld [vmem:[%s632 + $0x14] sm:$0xf]
      %v674 = vld [vmem:[%s632 + $0x18] sm:$0xf]
      %v675 = vld [vmem:[%s632 + $0x1c] sm:$0xf]
      %v676 = vld [vmem:[%s632 + $0x20] sm:$0xf]
      %v677 = vld [vmem:[%s632 + $0x24] sm:$0xf]
      %v678 = vld [vmem:[%s632 + $0x28] sm:$0xf]
      %v679 = vld [vmem:[%s632 + $0x2c] sm:$0xf]
      %v680 = vld [vmem:[%s632 + $0x30] sm:$0xf]
      %v681 = vld [vmem:[%s632 + $0x34] sm:$0xf]
      %v682 = vld [vmem:[%s632 + $0x38] sm:$0xf]
      %v683 = vld [vmem:[%s632 + $0x3c] sm:$0xf]
      %v684 = vld [vmem:[%s635] sm:$0x1]
      %vm685 = vcmask 261120
      %v686 = vsel %vm685, %v648, 0.0
      %687 = vadd.xlane.f32.xlu0 %v686
      %v688 = vpop.xlane.xlu0 %687
      %v689 = vrcp.pop 32.0
      %v690 = vmul.f32 32.0, %v689
      %v691 = vsub.f32 1.0, %v690
      %v692 = vmul.f32 %v689, %v691
      %v693 = vadd.f32 %v689, %v692
      %vm694 = vweird.f32 %v689
      %v695 = vsel %vm694, %v689, %v693
      %v696 = vmul.f32 %v688, %v695
      %v697 = vsub.f32 %v648, %v696
      %v698 = vmul.f32 %v697, %v697
      %v699 = vsel %vm685, %v698, 0.0
      %700 = vadd.xlane.f32.xlu0 %v699
      %v701 = vpop.xlane.xlu0 %700
      %v702 = vmul.f32 %v701, %v695
      %v703 = vadd.f32 %v702, 1e-05
      %v704 = vrsqrt.pop %v703
      %v705 = vmul.f32 %v704, %v703
      %v706 = vmul.f32 %v705, %v704
      %v707 = vmul.f32 0.5, %v706
      %v708 = vsub.f32 1.5, %v707
      %v709 = vmul.f32 %v704, %v708
      %vm710 = vweird.f32 %v703
      %vm711 = vweird.f32 %v704
      %vm712 = vmor %vm710, %vm711
      %v713 = vsel %vm712, %v704, %v709
      %v714 = vmul.f32 %v697, %v713
      %v716 = vperm.slane %v649, 0
      %v718 = vmul.f32 %v714, %v716
      %v720 = vperm.slane %v650, 0
      %v722 = vadd.f32 %v718, %v720
      %v723 = vpack.c.bf16 %v722, %v722
      %v725 = vperm.slane %v655, 0
      %v731 = vunpack.c.l.b16 %v651
      %v732 = vunpack.c.l.b16 %v652
      %v733 = vunpack.c.l.b16 %v653
      %v734 = vunpack.c.l.b16 %v654
      %v735 = vpack.c.b16 %v732, %v731
      %v736 = vpack.c.b16 %v734, %v733
      %v740 = vsel %vm685, %v723, 0
      %742 = vmatpush.bf16.msra.mxu0 0
      %743 = vmatpush.bf16.msra.mxu0 0
      %744 = vmatpush.bf16.msra.mxu0 0
      %745 = vmatpush.bf16.msra.mxu0 0
      %746 = vmatpush.bf16.msra.mxu0 0
      %747 = vmatpush.bf16.msra.mxu0 0
      %748 = vmatpush.bf16.msra.mxu0 %v736
      %749 = vmatpush.bf16.msra.mxu0 %v735
      %750 = vmatmul.bf16.gmra.mxu0 %v740
      %v751 = vpop.f32.mrf.mxu0
      %v752 = vadd.f32 %v725, %v751
      %v753 = vpop.f32.mrf.mxu0
      %754 = vdwg.mxu0
      %v755 = vmul.f32 %v752, 0.35355338
      %v756 = vpack.c.bf16 %v755, %v755
      %v757 = vpack.c.bf16 %v752, %v752
      %v759 = vunpack.c.l.b16 %v757
      %v760 = vpack.c.b16 %v759, %v759
      %761 = vrot.lane.b32.xlu0 %v760, 96
      %v762 = vpop.permute.xlu0 %761
      %vm763 = vcmask 64512
      %v765 = vsel %vm763, %v756, 0
      %v768 = vsel %vm763, %v762, 0
      %770 = vmatpush.bf16.xpose.msra.mxu0 0
      %771 = vmatpush.bf16.xpose.msra.mxu0 0
      %772 = vmatpush.bf16.xpose.msra.mxu0 0
      %773 = vmatpush.bf16.xpose.msra.mxu0 0
      %774 = vmatpush.bf16.xpose.msra.mxu0 0
      %775 = vmatpush.bf16.xpose.msra.mxu0 0
      %776 = vmatpush.bf16.xpose.msra.mxu0 0
      %777 = vmatpush.bf16.xpose.msra.mxu0 %v768
      %778 = vmatmul.bf16.gmra.mxu0 %v765
      %v779 = vpop.f32.mrf.mxu0
      %v780 = vadd.f32 0.0, %v779
      %v781 = vpop.f32.mrf.mxu0
      %782 = vdwg.mxu0
      %v783 = vsel %vm763, %v780, -inf
      %784 = vmax.xlane.f32.xlu0 %v783
      %v785 = vpop.xlane.xlu0 %784
      %v786 = vsub.f32 %v780, %v785
      %v787 = vmul.f32 %v786, 1.442695
      %v788 = vpow.pop %v787
      %v789 = vsel %vm763, %v788, 0.0
      %790 = vadd.xlane.f32.xlu0 %v789
      %v791 = vpop.xlane.xlu0 %790
      %v792 = vrcp.pop %v791
      %v793 = vmul.f32 %v788, %v792
      %v794 = vpack.c.bf16 %v793, %v793
      %795 = vrot.lane.b32.xlu0 %v760, 64
      %v796 = vpop.permute.xlu0 %795
      %v798 = vsel %vm763, %v794, 0
      %vm800 = vcmask 1043456
      %v802 = vsel %vm800, %v796, 0
      %804 = vmatpush.bf16.msra.mxu0 0
      %805 = vmatpush.bf16.msra.mxu0 0
      %806 = vmatpush.bf16.msra.mxu0 0
      %807 = vmatpush.bf16.msra.mxu0 0
      %808 = vmatpush.bf16.msra.mxu0 0
      %809 = vmatpush.bf16.msra.mxu0 0
      %810 = vmatpush.bf16.msra.mxu0 0
      %811 = vmatpush.bf16.msra.mxu0 %v802
      %812 = vmatmul.bf16.gmra.mxu0 %v798
      %v813 = vpop.f32.mrf.mxu0
      %v814 = vadd.f32 0.0, %v813
      %v815 = vpop.f32.mrf.mxu0
      %816 = vdwg.mxu0
      %v818 = vunpack.c.l.b16 %v756
      %v819 = vpack.c.b16 %v818, %v818
      %820 = vrot.lane.b32.xlu0 %v819, 120
      %v821 = vpop.permute.xlu0 %820
      %822 = vrot.lane.b32.xlu0 %v760, 88
      %v823 = vpop.permute.xlu0 %822
      %v825 = vsel %vm763, %v821, 0
      %v828 = vsel %vm763, %v823, 0
      %830 = vmatpush.bf16.xpose.msra.mxu0 0
      %831 = vmatpush.bf16.xpose.msra.mxu0 0
      %832 = vmatpush.bf16.xpose.msra.mxu0 0
      %833 = vmatpush.bf16.xpose.msra.mxu0 0
      %834 = vmatpush.bf16.xpose.msra.mxu0 0
      %835 = vmatpush.bf16.xpose.msra.mxu0 0
      %836 = vmatpush.bf16.xpose.msra.mxu0 0
      %837 = vmatpush.bf16.xpose.msra.mxu0 %v828
      %838 = vmatmul.bf16.gmra.mxu0 %v825
      %v839 = vpop.f32.mrf.mxu0
      %v840 = vadd.f32 0.0, %v839
      %v841 = vpop.f32.mrf.mxu0
      %842 = vdwg.mxu0
      %v843 = vsel %vm763, %v840, -inf
      %844 = vmax.xlane.f32.xlu0 %v843
      %v845 = vpop.xlane.xlu0 %844
      %v846 = vsub.f32 %v840, %v845
      %v847 = vmul.f32 %v846, 1.442695
      %v848 = vpow.pop %v847
      %v849 = vsel %vm763, %v848, 0.0
      %850 = vadd.xlane.f32.xlu0 %v849
      %v851 = vpop.xlane.xlu0 %850
      %v852 = vrcp.pop %v851
      %v853 = vmul.f32 %v848, %v852
      %v854 = vpack.c.bf16 %v853, %v853
      %855 = vrot.lane.b32.xlu0 %v760, 56
      %v856 = vpop.permute.xlu0 %855
      %v858 = vsel %vm763, %v854, 0
      %v861 = vsel %vm800, %v856, 0
      %863 = vmatpush.bf16.msra.mxu0 0
      %864 = vmatpush.bf16.msra.mxu0 0
      %865 = vmatpush.bf16.msra.mxu0 0
      %866 = vmatpush.bf16.msra.mxu0 0
      %867 = vmatpush.bf16.msra.mxu0 0
      %868 = vmatpush.bf16.msra.mxu0 0
      %869 = vmatpush.bf16.msra.mxu0 0
      %870 = vmatpush.bf16.msra.mxu0 %v861
      %871 = vmatmul.bf16.gmra.mxu0 %v858
      %v872 = vpop.f32.mrf.mxu0
      %v873 = vadd.f32 0.0, %v872
      %v874 = vpop.f32.mrf.mxu0
      %875 = vdwg.mxu0
      %876 = vrot.lane.b32.xlu0 %v819, 112
      %v877 = vpop.permute.xlu0 %876
      %878 = vrot.lane.b32.xlu0 %v760, 80
      %v879 = vpop.permute.xlu0 %878
      %v881 = vsel %vm763, %v877, 0
      %v884 = vsel %vm763, %v879, 0
      %886 = vmatpush.bf16.xpose.msra.mxu0 0
      %887 = vmatpush.bf16.xpose.msra.mxu0 0
      %888 = vmatpush.bf16.xpose.msra.mxu0 0
      %889 = vmatpush.bf16.xpose.msra.mxu0 0
      %890 = vmatpush.bf16.xpose.msra.mxu0 0
      %891 = vmatpush.bf16.xpose.msra.mxu0 0
      %892 = vmatpush.bf16.xpose.msra.mxu0 0
      %893 = vmatpush.bf16.xpose.msra.mxu0 %v884
      %894 = vmatmul.bf16.gmra.mxu0 %v881
      %v895 = vpop.f32.mrf.mxu0
      %v896 = vadd.f32 0.0, %v895
      %v897 = vpop.f32.mrf.mxu0
      %898 = vdwg.mxu0
      %v899 = vsel %vm763, %v896, -inf
      %900 = vmax.xlane.f32.xlu0 %v899
      %v901 = vpop.xlane.xlu0 %900
      %v902 = vsub.f32 %v896, %v901
      %v903 = vmul.f32 %v902, 1.442695
      %v904 = vpow.pop %v903
      %v905 = vsel %vm763, %v904, 0.0
      %906 = vadd.xlane.f32.xlu0 %v905
      %v907 = vpop.xlane.xlu0 %906
      %v908 = vrcp.pop %v907
      %v909 = vmul.f32 %v904, %v908
      %v910 = vpack.c.bf16 %v909, %v909
      %911 = vrot.lane.b32.xlu0 %v760, 48
      %v912 = vpop.permute.xlu0 %911
      %v914 = vsel %vm763, %v910, 0
      %v917 = vsel %vm800, %v912, 0
      %919 = vmatpush.bf16.msra.mxu0 0
      %920 = vmatpush.bf16.msra.mxu0 0
      %921 = vmatpush.bf16.msra.mxu0 0
      %922 = vmatpush.bf16.msra.mxu0 0
      %923 = vmatpush.bf16.msra.mxu0 0
      %924 = vmatpush.bf16.msra.mxu0 0
      %925 = vmatpush.bf16.msra.mxu0 0
      %926 = vmatpush.bf16.msra.mxu0 %v917
      %927 = vmatmul.bf16.gmra.mxu0 %v914
      %v928 = vpop.f32.mrf.mxu0
      %v929 = vadd.f32 0.0, %v928
      %v930 = vpop.f32.mrf.mxu0
      %931 = vdwg.mxu0
      %932 = vrot.lane.b32.xlu0 %v819, 104
      %v933 = vpop.permute.xlu0 %932
      %934 = vrot.lane.b32.xlu0 %v760, 72
      %v935 = vpop.permute.xlu0 %934
      %v937 = vsel %vm763, %v933, 0
      %v940 = vsel %vm763, %v935, 0
      %942 = vmatpush.bf16.xpose.msra.mxu0 0
      %943 = vmatpush.bf16.xpose.msra.mxu0 0
      %944 = vmatpush.bf16.xpose.msra.mxu0 0
      %945 = vmatpush.bf16.xpose.msra.mxu0 0
      %946 = vmatpush.bf16.xpose.msra.mxu0 0
      %947 = vmatpush.bf16.xpose.msra.mxu0 0
      %948 = vmatpush.bf16.xpose.msra.mxu0 0
      %949 = vmatpush.bf16.xpose.msra.mxu0 %v940
      %950 = vmatmul.bf16.gmra.mxu0 %v937
      %v951 = vpop.f32.mrf.mxu0
      %v952 = vadd.f32 0.0, %v951
      %v953 = vpop.f32.mrf.mxu0
      %954 = vdwg.mxu0
      %v955 = vsel %vm763, %v952, -inf
      %956 = vmax.xlane.f32.xlu0 %v955
      %v957 = vpop.xlane.xlu0 %956
      %v958 = vsub.f32 %v952, %v957
      %v959 = vmul.f32 %v958, 1.442695
      %v960 = vpow.pop %v959
      %v961 = vsel %vm763, %v960, 0.0
      %962 = vadd.xlane.f32.xlu0 %v961
      %v963 = vpop.xlane.xlu0 %962
      %v964 = vrcp.pop %v963
      %v965 = vmul.f32 %v960, %v964
      %v966 = vpack.c.bf16 %v965, %v965
      %967 = vrot.lane.b32.xlu0 %v760, 40
      %v968 = vpop.permute.xlu0 %967
      %v970 = vsel %vm763, %v966, 0
      %v973 = vsel %vm800, %v968, 0
      %975 = vmatpush.bf16.msra.mxu0 0
      %976 = vmatpush.bf16.msra.mxu0 0
      %977 = vmatpush.bf16.msra.mxu0 0
      %978 = vmatpush.bf16.msra.mxu0 0
      %979 = vmatpush.bf16.msra.mxu0 0
      %980 = vmatpush.bf16.msra.mxu0 0
      %981 = vmatpush.bf16.msra.mxu0 0
      %982 = vmatpush.bf16.msra.mxu0 %v973
      %983 = vmatmul.bf16.gmra.mxu0 %v970
      %v984 = vpop.f32.mrf.mxu0
      %v985 = vadd.f32 0.0, %v984
      %v986 = vpop.f32.mrf.mxu0
      %987 = vdwg.mxu0
      %989 = vrot.lane.b32.xlu0 %v873, 8
      %v990 = vpop.permute.xlu0 %989
      %993 = vrot.lane.b32.xlu0 %v929, 16
      %v994 = vpop.permute.xlu0 %993
      %997 = vrot.lane.b32.xlu0 %v985, 24
      %v998 = vpop.permute.xlu0 %997
      %v1000 = vsel %vm763, %v814, %v990
      %vm1001 = vcmask 130048
      %v1002 = vsel %vm1001, %v1000, %v994
      %vm1003 = vcmask 195584
      %v1004 = vsel %vm1003, %v1002, %v998
      %v1005 = vpack.c.bf16 %v1004, %v1004
      %v1007 = vperm.slane %v660, 0
      %v1013 = vunpack.c.l.b16 %v656
      %v1014 = vunpack.c.l.b16 %v657
      %v1015 = vunpack.c.l.b16 %v658
      %v1016 = vunpack.c.l.b16 %v659
      %v1017 = vpack.c.b16 %v1014, %v1013
      %v1018 = vpack.c.b16 %v1016, %v1015
      %v1022 = vsel %vm685, %v1005, 0
      %1024 = vmatpush.bf16.msra.mxu0 0
      %1025 = vmatpush.bf16.msra.mxu0 0
      %1026 = vmatpush.bf16.msra.mxu0 0
      %1027 = vmatpush.bf16.msra.mxu0 0
      %1028 = vmatpush.bf16.msra.mxu0 0
      %1029 = vmatpush.bf16.msra.mxu0 0
      %1030 = vmatpush.bf16.msra.mxu0 %v1018
      %1031 = vmatpush.bf16.msra.mxu0 %v1017
      %1032 = vmatmul.bf16.gmra.mxu0 %v1022
      %v1033 = vpop.f32.mrf.mxu0
      %v1034 = vadd.f32 %v1007, %v1033
      %v1035 = vpop.f32.mrf.mxu0
      %1036 = vdwg.mxu0
      %v1037 = vadd.f32 %v648, %v1034
      %v1038 = vsel %vm685, %v1037, 0.0
      %1039 = vadd.xlane.f32.xlu0 %v1038
      %v1040 = vpop.xlane.xlu0 %1039
      %v1041 = vmul.f32 %v1040, %v695
      %v1042 = vsub.f32 %v1037, %v1041
      %v1043 = vmul.f32 %v1042, %v1042
      %v1044 = vsel %vm685, %v1043, 0.0
      %1045 = vadd.xlane.f32.xlu0 %v1044
      %v1046 = vpop.xlane.xlu0 %1045
      %v1047 = vmul.f32 %v1046, %v695
      %v1048 = vadd.f32 %v1047, 1e-05
      %v1049 = vrsqrt.pop %v1048
      %v1050 = vmul.f32 %v1049, %v1048
      %v1051 = vmul.f32 %v1050, %v1049
      %v1052 = vmul.f32 0.5, %v1051
      %v1053 = vsub.f32 1.5, %v1052
      %v1054 = vmul.f32 %v1049, %v1053
      %vm1055 = vweird.f32 %v1048
      %vm1056 = vweird.f32 %v1049
      %vm1057 = vmor %vm1055, %vm1056
      %v1058 = vsel %vm1057, %v1049, %v1054
      %v1059 = vmul.f32 %v1042, %v1058
      %v1061 = vperm.slane %v661, 0
      %v1063 = vmul.f32 %v1059, %v1061
      %v1065 = vperm.slane %v662, 0
      %v1067 = vadd.f32 %v1063, %v1065
      %v1068 = vpack.c.bf16 %v1067, %v1067
      %v1070 = vperm.slane %v667, 0
      %v1076 = vunpack.c.l.b16 %v663
      %v1077 = vunpack.c.l.b16 %v664
      %v1078 = vunpack.c.l.b16 %v665
      %v1079 = vunpack.c.l.b16 %v666
      %v1080 = vpack.c.b16 %v1077, %v1076
      %v1081 = vpack.c.b16 %v1079, %v1078
      %v1085 = vsel %vm685, %v1068, 0
      %1087 = vmatpush.bf16.msra.mxu0 0
      %1088 = vmatpush.bf16.msra.mxu0 0
      %1089 = vmatpush.bf16.msra.mxu0 0
      %1090 = vmatpush.bf16.msra.mxu0 0
      %1091 = vmatpush.bf16.msra.mxu0 0
      %1092 = vmatpush.bf16.msra.mxu0 0
      %1093 = vmatpush.bf16.msra.mxu0 %v1081
      %1094 = vmatpush.bf16.msra.mxu0 %v1080
      %1095 = vmatmul.bf16.gmra.mxu0 %v1085
      %v1096 = vpop.f32.mrf.mxu0
      %v1097 = vadd.f32 %v1070, %v1096
      %v1098 = vpop.f32.mrf.mxu0
      %1099 = vdwg.mxu0
      %v1100 = vmul.f32 %v1097, 1.702
      %v1101 = vxor.u32 %v1100, 2147483648
      %v1102 = vmul.f32 %v1101, 1.442695
      %v1103 = vpow.pop %v1102
      %v1104 = vadd.f32 %v1103, 1.0
      %v1105 = vrcp.pop %v1104
      %v1106 = vmul.f32 %v1104, %v1105
      %v1107 = vsub.f32 1.0, %v1106
      %v1108 = vmul.f32 %v1105, %v1107
      %v1109 = vadd.f32 %v1105, %v1108
      %vm1110 = vweird.f32 %v1104
      %vm1111 = vweird.f32 %v1105
      %vm1112 = vmor %vm1110, %vm1111
      %v1113 = vsel %vm1112, %v1105, %v1109
      %v1114 = vand.u32 2147483647, %v1104
      %vm1115 = vcmp.eq.f32.partialorder %v1114, 8.507059e+37
      %v1116 = vand.u32 %v1104, 2147483648
      %v1117 = vor.u32 1.1754944e-38, %v1116
      %v1118 = vsel %vm1115, %v1117, %v1113
      %v1119 = vmul.f32 1.0, %v1118
      %v1120 = vmul.f32 %v1097, %v1119
      %v1121 = vpack.c.bf16 %v1120, %v1120
      %v1123 = vperm.slane %v684, 0
      %v1141 = vunpack.c.l.b16 %v668
      %v1142 = vunpack.c.l.b16 %v669
      %v1143 = vunpack.c.l.b16 %v670
      %v1144 = vunpack.c.l.b16 %v671
      %v1145 = vunpack.c.l.b16 %v672
      %v1146 = vunpack.c.l.b16 %v673
      %v1147 = vunpack.c.l.b16 %v674
      %v1148 = vunpack.c.l.b16 %v675
      %v1149 = vunpack.c.l.b16 %v676
      %v1150 = vunpack.c.l.b16 %v677
      %v1151 = vunpack.c.l.b16 %v678
      %v1152 = vunpack.c.l.b16 %v679
      %v1153 = vunpack.c.l.b16 %v680
      %v1154 = vunpack.c.l.b16 %v681
      %v1155 = vunpack.c.l.b16 %v682
      %v1156 = vunpack.c.l.b16 %v683
      %v1157 = vpack.c.b16 %v1142, %v1141
      %v1158 = vpack.c.b16 %v1144, %v1143
      %v1159 = vpack.c.b16 %v1146, %v1145
      %v1160 = vpack.c.b16 %v1148, %v1147
      %v1161 = vpack.c.b16 %v1150, %v1149
      %v1162 = vpack.c.b16 %v1152, %v1151
      %v1163 = vpack.c.b16 %v1154, %v1153
      %v1164 = vpack.c.b16 %v1156, %v1155
      %1173 = vmatpush.bf16.msra.mxu0 %v1164
      %1174 = vmatpush.bf16.msra.mxu0 %v1163
      %1175 = vmatpush.bf16.msra.mxu0 %v1162
      %1176 = vmatpush.bf16.msra.mxu0 %v1161
      %1177 = vmatpush.bf16.msra.mxu0 %v1160
      %1178 = vmatpush.bf16.msra.mxu0 %v1159
      %1179 = vmatpush.bf16.msra.mxu0 %v1158
      %1180 = vmatpush.bf16.msra.mxu0 %v1157
      %1181 = vmatmul.bf16.gmra.mxu0 %v1121
      %v1182 = vpop.f32.mrf.mxu0
      %v1183 = vadd.f32 %v1123, %v1182
      %v1184 = vpop.f32.mrf.mxu0
      %1185 = vdwg.mxu0
      %v1186 = vadd.f32 %v1037, %v1183
      %1187 = vst.msk [vmem:[%s639] sm:$0xff] %vm685, %v1186
      %p1188 = scmp.lt.s32.totalorder %s28, 1
      %s1189 = scalar_select %p1188, %s28, 1
      %s1190 = smul.addr %s1189, 8
      %s1191 = scalar_lea.vmem %s13, %s1190
      // Predicated region
      $region77: #{transformer_forward.1} parent=71 // pred_check
        %p1192 = pneg %p392
      $region78: #{transformer_forward.1} parent=71 // pred_check_branch
        %1194 = sbr.rel (%p1192) target = $region80
      $region79: #{transformer_forward.1} parent=71 // pred_region
        _
      $region80: #{transformer_forward.1} parent=71 // pred_fallthru
        _
    $region72: #{transformer_forward.1} parent=5 // pred_fallthru
      _
    %p1195 = scmp.le.s32.totalorder 2, %s19
    // Predicated region
    $region81: #{transformer_forward.1} parent=5 // pred_check
      %p1196 = pneg %p1195
    $region82: #{transformer_forward.1} parent=5 // pred_check_branch
      %1198 = sbr.rel (%p1196) target = $region84
    $region83: #{transformer_forward.1} parent=5 // pred_region
      %s1199 = ssub.s32 %s19, 2
      // Predicated region
      $region85: #{transformer_forward.1} parent=83 // pred_check
        %p1200 = pneg %p398
      $region86: #{transformer_forward.1} parent=83 // pred_check_branch
        %1202 = sbr.rel (%p1200) target = $region88
      $region87: #{transformer_forward.1} parent=83 // pred_region
        %p1203 = scmp.lt.s32.totalorder %s30, 1
        %s1204 = scalar_select %p1203, %s30, 1
        %s1205 = smul.addr %s1204, 8
        %s1206 = scalar_lea.vmem %s13, %s1205
      $region88: #{transformer_forward.1} parent=83 // pred_fallthru
        _
    $region84: #{transformer_forward.1} parent=5 // pred_fallthru
      _
  $region6: #{transformer_forward.1} parent=0 // loop_footer
    %s23 = sadd.s32 1, %s19
  $region7: #{transformer_forward.1} parent=0 // loop_footer_branch
    %18 = sbr.rel target = $region3
  $region8: #{transformer_forward.1} parent=0 // loop_exit
    _

</llo_original>
